<compile_context>
chip_gen: v7x
topology: tpu7x:2x2x1
jax: 0.10.0
libtpu: 0.0.40
codegen_flags: <defaults>
</compile_context>

<pallas_src>
import functools

import jax
import jax.numpy as jnp
from jax.experimental import pallas as pl
from jax.experimental.pallas import tpu as pltpu

# ----------------------------- hyper parameters -----------------------------
WIDTH = 32            # width
NUM_BLOCKS = [2]      # num_blocks
DEPTH = 12            # depth; (depth - 4) % 4 == 0
ITERS = (DEPTH - 4) // 4
assert (DEPTH - 4) % 4 == 0, "Depth not compatible with recurrent architecture."

BATCH = 2
SEQ = 16              # sequence length L
OUT_LANES = 128       # lane-dense padded output width (real channels = 2)


# --------------------------------- kernel -----------------------------------
def recur_injected_kernel(act_ref, w_ref, c4_ref, o_ref, *,
                          m, wpad, n_blocks, iters):
    """act_ref: (4m, wpad) f32, w_ref: (7*wpad, wpad) bf16, c4_ref: (wpad, 128) bf16."""
    f32 = jnp.float32
    bf16 = jnp.bfloat16

    # Precomputed (in the wrapper) boundary/lane-group masks; small and reused
    # by every conv, so hoisting them costs ~9 vregs total.
    xb = act_ref[pl.ds(0 * m, m), :]          # x replicated across all 96 lanes
    mprev = act_ref[pl.ds(1 * m, m), :]       # lanes 0..W-1,  zero on first-in-seq rows
    mmid = act_ref[pl.ds(2 * m, m), :]        # lanes W..2W-1
    mnext = act_ref[pl.ds(3 * m, m), :]       # lanes 2W..3W-1, zero on last-in-seq rows

    def to_x3(r):
        # r is in replicated form [a, a, a]; returns [a[l-1], a[l], a[l+1]]
        # (per 32-lane group, zeroed across sequence boundaries).
        down = pltpu.roll(r, shift=1, axis=0)        # row l <- row l-1
        up = pltpu.roll(r, shift=m - 1, axis=0)      # row l <- row l+1
        return down * mprev + r * mmid + up * mnext  # fused 3-way select (VPU, f32)

    def conv(r, w_idx):
        # k=3 / pad=1 / stride=1 conv as ONE bf16 MXU matmul with f32 accumulation.
        a3 = to_x3(r).astype(bf16)
        w = w_ref[pl.ds(w_idx * wpad, wpad), :]      # loaded at the use site (no hoist)
        return jnp.dot(a3, w, preferred_element_type=f32)

    # conv1 (Cin=1): weight pre-expanded to per-tap block-diagonal (96,96) matrix.
    new_x = jax.nn.relu(conv(xb, 0))                 # replicated form [y, y, y]

    out = jnp.zeros_like(new_x)
    for _ in range(iters):                           # recurrent injected block
        out = out + new_x                            # inject new_x each iteration
        for b in range(n_blocks):                    # BasicBlocks (identity shortcut)
            h = jax.nn.relu(conv(out, 1 + 2 * b))
            out = jax.nn.relu(conv(h, 2 + 2 * b) + out)

    # _project_thought: relu(conv2) -> relu(conv3) -> conv4  (lane-padded)
    base = 1 + 2 * n_blocks
    t = jax.nn.relu(conv(out, base))                 # conv2
    t = jax.nn.relu(conv(t, base + 1))               # conv3 (Cout 16 padded to 32)
    a3 = to_x3(t).astype(bf16)
    o_ref[...] = jnp.dot(a3, c4_ref[...],            # conv4 -> (m, 128), lanes 0..1 real
                         preferred_element_type=f32).astype(o_ref.dtype)


# --------------------------------- wrapper -----------------------------------
def recur_injected_net(x, params):
    """x: (N, 1, L) float32 (torch NCL layout). Returns (N, 2, L)."""
    N, Cin, L = x.shape
    assert Cin == 1
    W = params["conv1"].shape[0]
    WPAD = 3 * W
    M = N * L

    def fused(w, pad_cin_to=None, pad_cout_to=None):
        # torch (Cout, Cin, 3) -> fused (3*Cin', Cout') with tap-major rows.
        wk = jnp.transpose(w, (2, 1, 0))              # (3, Cin, Cout)
        if pad_cin_to is not None:
            wk = jnp.pad(wk, ((0, 0), (0, pad_cin_to - wk.shape[1]), (0, 0)))
        if pad_cout_to is not None:
            wk = jnp.pad(wk, ((0, 0), (0, 0), (0, pad_cout_to - wk.shape[2])))
        return wk.reshape(3 * wk.shape[1], wk.shape[2])

    def tiled(w, pad_cout_to=None):
        # Replicate Cout 3x along lanes so the matmul emits [y, y, y] directly.
        return jnp.tile(fused(w, pad_cout_to=pad_cout_to), (1, 3))   # (3W, 3W)

    # conv1 (Cin=1) expanded to a (3W, 3W) block matrix of per-tap diagonals.
    w1_taps = jnp.transpose(params["conv1"][:, 0, :], (1, 0))        # (3, W): [tap, cout]
    c1_mat = jnp.concatenate(
        [jnp.tile(jnp.diag(w1_taps[g]), (1, 3)) for g in range(3)], axis=0)

    # Single weight slab: [conv1, blk*_w1/w2, conv2, conv3], all (3W, 3W), bf16.
    w_list = [c1_mat]
    for (w1, w2) in params["blocks"]:
        w_list += [tiled(w1), tiled(w2)]
    w_list += [tiled(params["conv2"]), tiled(params["conv3"], pad_cout_to=W)]
    w_slab = jnp.concatenate(w_list, axis=0).astype(jnp.bfloat16)    # (7*3W, 3W)

    c4_w = fused(params["conv4"], pad_cin_to=W,
                 pad_cout_to=OUT_LANES).astype(jnp.bfloat16)         # (3W, 128)

    # Activation + mask slab (single DMA): batch folded into sublanes,
    # 1-channel input lane-replicated, boundary/lane-group masks precomputed.
    xb = jnp.broadcast_to(
        jnp.reshape(x[:, 0, :], (M, 1)).astype(jnp.float32), (M, WPAD))
    row = jnp.arange(M)[:, None] % L
    lane = jnp.arange(WPAD)[None, :]
    mprev = ((lane < W) & (row != 0)).astype(jnp.float32)
    mmid = jnp.broadcast_to(
        ((lane >= W) & (lane < 2 * W)).astype(jnp.float32), (M, WPAD))
    mnext = ((lane >= 2 * W) & (row != L - 1)).astype(jnp.float32)
    act_slab = jnp.concatenate([xb, mprev, mmid, mnext], axis=0)     # (4M, 3W) f32

    kernel = functools.partial(
        recur_injected_kernel, m=M, wpad=WPAD,
        n_blocks=len(params["blocks"]), iters=ITERS)

    # Single invocation (no grid): every operand is a full-array VMEM block.
    out_flat = pl.pallas_call(
        kernel,
        out_shape=jax.ShapeDtypeStruct((M, OUT_LANES), jnp.float32),
    )(act_slab, w_slab, c4_w)

    out = out_flat[:, :2].reshape(N, L, 2)            # drop lane padding
    return jnp.transpose(out, (0, 2, 1))              # (N, 2, L) like PyTorch


# --------------------------- params & pure-JAX ref ---------------------------
def init_params(key):
    W = WIDTH

    def conv_w(k, cout, cin):
        fan_in = cin * 3
        return (jax.random.normal(k, (cout, cin, 3), jnp.float32)
                * (0.5 / jnp.sqrt(float(fan_in))))

    keys = jax.random.split(key, 5 + 2 * NUM_BLOCKS[0])
    blocks = []
    for b in range(NUM_BLOCKS[0]):
        blocks.append((conv_w(keys[1 + 2 * b], W, W),
                       conv_w(keys[2 + 2 * b], W, W)))
    return {
        "conv1": conv_w(keys[0], W, 1),
        "blocks": blocks,
        "conv2": conv_w(keys[1 + 2 * NUM_BLOCKS[0]], W, W),
        "conv3": conv_w(keys[2 + 2 * NUM_BLOCKS[0]], W // 2, W),
        "conv4": conv_w(keys[3 + 2 * NUM_BLOCKS[0]], 2, W // 2),
    }


def _conv1d_ref(x, w):  # x: (N, C, L), w: (Cout, Cin, 3)
    return jax.lax.conv_general_dilated(
        x, w, window_strides=(1,), padding=((1, 1),),
        dimension_numbers=("NCH", "OIH", "NCH"))


def forward_ref(x, params):
    new_x = jax.nn.relu(_conv1d_ref(x, params["conv1"]))
    out = jnp.zeros_like(new_x)
    for _ in range(ITERS):
        out = out + new_x
        for (w1, w2) in params["blocks"]:
            h = jax.nn.relu(_conv1d_ref(out, w1))
            h = _conv1d_ref(h, w2) + out
            out = jax.nn.relu(h)
    t = jax.nn.relu(_conv1d_ref(out, params["conv2"]))
    t = jax.nn.relu(_conv1d_ref(t, params["conv3"]))
    return _conv1d_ref(t, params["conv4"])


# ----------------------------------- main ------------------------------------
if __name__ == "__main__":
    key = jax.random.PRNGKey(0)
    k_x, k_p = jax.random.split(key)
    x = jax.random.normal(k_x, (BATCH, 1, SEQ), jnp.float32)   # torch NCL input
    params = init_params(k_p)

    out = recur_injected_net(x, params)
    out = jax.block_until_ready(out)
    assert out.shape == (BATCH, 2, SEQ), out.shape

    ref = jax.block_until_ready(forward_ref(x, params))
    max_err = float(jnp.max(jnp.abs(out - ref)))
    # Kernel uses single-pass bf16 MXU matmuls (f32 accumulation); reference is
    # full f32, so tolerance reflects bf16 input rounding through ~12 convs.
    assert max_err < 5e-2, f"mismatch vs reference: {max_err}"

    print("KERNEL_OK")
</pallas_src>

<mosaic_0001>
module attributes {stable_mosaic.version = 11 : i64} {
  func.func @recur_injected_kernel(%arg0: memref<128x96xf32, #tpu.memory_space<vmem>>, %arg1: memref<672x96xbf16, #tpu.memory_space<vmem>>, %arg2: memref<96x128xbf16, #tpu.memory_space<vmem>>, %arg3: memref<32x128xf32, #tpu.memory_space<vmem>>) attributes {dimension_semantics = [], scalar_prefetch = 0 : i64, scratch_operands = 0 : i64, tpu.core_type = #tpu.core_type<tc>} {
    %c0 = arith.constant 0 : index
    %c0_0 = arith.constant 0 : index
    %0 = vector.load %arg0[%c0, %c0_0] : memref<128x96xf32, #tpu.memory_space<vmem>>, vector<32x96xf32>
    %c32 = arith.constant 32 : index
    %c0_1 = arith.constant 0 : index
    %1 = vector.load %arg0[%c32, %c0_1] : memref<128x96xf32, #tpu.memory_space<vmem>>, vector<32x96xf32>
    %c64 = arith.constant 64 : index
    %c0_2 = arith.constant 0 : index
    %2 = vector.load %arg0[%c64, %c0_2] : memref<128x96xf32, #tpu.memory_space<vmem>>, vector<32x96xf32>
    %c96 = arith.constant 96 : index
    %c0_3 = arith.constant 0 : index
    %3 = vector.load %arg0[%c96, %c0_3] : memref<128x96xf32, #tpu.memory_space<vmem>>, vector<32x96xf32>
    %c1_i32 = arith.constant 1 : i32
    %4 = tpu.dynamic_rotate %0 by %c1_i32 dim 0 : vector<32x96xf32>, i32 -> vector<32x96xf32>
    %c31_i32 = arith.constant 31 : i32
    %5 = tpu.dynamic_rotate %0 by %c31_i32 dim 0 : vector<32x96xf32>, i32 -> vector<32x96xf32>
    %6 = arith.mulf %4, %1 : vector<32x96xf32>
    %7 = arith.mulf %0, %2 : vector<32x96xf32>
    %8 = arith.addf %6, %7 : vector<32x96xf32>
    %9 = arith.mulf %5, %3 : vector<32x96xf32>
    %10 = arith.addf %8, %9 : vector<32x96xf32>
    %11 = arith.truncf %10 : vector<32x96xf32> to vector<32x96xbf16>
    %c0_4 = arith.constant 0 : index
    %c0_5 = arith.constant 0 : index
    %12 = vector.load %arg1[%c0_4, %c0_5] : memref<672x96xbf16, #tpu.memory_space<vmem>>, vector<96x96xbf16>
    %cst = arith.constant dense<0.000000e+00> : vector<32x96xf32>
    %13 = tpu.matmul %11, %12, %cst {dimension_numbers = #tpu.dot_dimension_numbers<[1], [0], [0], [1], [0, 0, 1, 1], [], []>} : vector<32x96xbf16>, vector<96x96xbf16>, vector<32x96xf32> -> vector<32x96xf32>
    %cst_6 = arith.constant 0.000000e+00 : f32
    %14 = vector.broadcast %cst_6 : f32 to vector<32x96xf32>
    %15 = arith.maximumf %13, %14 : vector<32x96xf32>
    %cst_7 = arith.constant 0.000000e+00 : f32
    %16 = vector.broadcast %cst_7 : f32 to vector<32x96xf32>
    %17 = arith.addf %16, %15 : vector<32x96xf32>
    %c1_i32_8 = arith.constant 1 : i32
    %18 = tpu.dynamic_rotate %17 by %c1_i32_8 dim 0 : vector<32x96xf32>, i32 -> vector<32x96xf32>
    %c31_i32_9 = arith.constant 31 : i32
    %19 = tpu.dynamic_rotate %17 by %c31_i32_9 dim 0 : vector<32x96xf32>, i32 -> vector<32x96xf32>
    %20 = arith.mulf %18, %1 : vector<32x96xf32>
    %21 = arith.mulf %17, %2 : vector<32x96xf32>
    %22 = arith.addf %20, %21 : vector<32x96xf32>
    %23 = arith.mulf %19, %3 : vector<32x96xf32>
    %24 = arith.addf %22, %23 : vector<32x96xf32>
    %25 = arith.truncf %24 : vector<32x96xf32> to vector<32x96xbf16>
    %c96_10 = arith.constant 96 : index
    %c0_11 = arith.constant 0 : index
    %26 = vector.load %arg1[%c96_10, %c0_11] : memref<672x96xbf16, #tpu.memory_space<vmem>>, vector<96x96xbf16>
    %cst_12 = arith.constant dense<0.000000e+00> : vector<32x96xf32>
    %27 = tpu.matmul %25, %26, %cst_12 {dimension_numbers = #tpu.dot_dimension_numbers<[1], [0], [0], [1], [0, 0, 1, 1], [], []>} : vector<32x96xbf16>, vector<96x96xbf16>, vector<32x96xf32> -> vector<32x96xf32>
    %cst_13 = arith.constant 0.000000e+00 : f32
    %28 = vector.broadcast %cst_13 : f32 to vector<32x96xf32>
    %29 = arith.maximumf %27, %28 : vector<32x96xf32>
    %c1_i32_14 = arith.constant 1 : i32
    %30 = tpu.dynamic_rotate %29 by %c1_i32_14 dim 0 : vector<32x96xf32>, i32 -> vector<32x96xf32>
    %c31_i32_15 = arith.constant 31 : i32
    %31 = tpu.dynamic_rotate %29 by %c31_i32_15 dim 0 : vector<32x96xf32>, i32 -> vector<32x96xf32>
    %32 = arith.mulf %30, %1 : vector<32x96xf32>
    %33 = arith.mulf %29, %2 : vector<32x96xf32>
    %34 = arith.addf %32, %33 : vector<32x96xf32>
    %35 = arith.mulf %31, %3 : vector<32x96xf32>
    %36 = arith.addf %34, %35 : vector<32x96xf32>
    %37 = arith.truncf %36 : vector<32x96xf32> to vector<32x96xbf16>
    %c192 = arith.constant 192 : index
    %c0_16 = arith.constant 0 : index
    %38 = vector.load %arg1[%c192, %c0_16] : memref<672x96xbf16, #tpu.memory_space<vmem>>, vector<96x96xbf16>
    %cst_17 = arith.constant dense<0.000000e+00> : vector<32x96xf32>
    %39 = tpu.matmul %37, %38, %cst_17 {dimension_numbers = #tpu.dot_dimension_numbers<[1], [0], [0], [1], [0, 0, 1, 1], [], []>} : vector<32x96xbf16>, vector<96x96xbf16>, vector<32x96xf32> -> vector<32x96xf32>
    %40 = arith.addf %39, %17 : vector<32x96xf32>
    %cst_18 = arith.constant 0.000000e+00 : f32
    %41 = vector.broadcast %cst_18 : f32 to vector<32x96xf32>
    %42 = arith.maximumf %40, %41 : vector<32x96xf32>
    %c1_i32_19 = arith.constant 1 : i32
    %43 = tpu.dynamic_rotate %42 by %c1_i32_19 dim 0 : vector<32x96xf32>, i32 -> vector<32x96xf32>
    %c31_i32_20 = arith.constant 31 : i32
    %44 = tpu.dynamic_rotate %42 by %c31_i32_20 dim 0 : vector<32x96xf32>, i32 -> vector<32x96xf32>
    %45 = arith.mulf %43, %1 : vector<32x96xf32>
    %46 = arith.mulf %42, %2 : vector<32x96xf32>
    %47 = arith.addf %45, %46 : vector<32x96xf32>
    %48 = arith.mulf %44, %3 : vector<32x96xf32>
    %49 = arith.addf %47, %48 : vector<32x96xf32>
    %50 = arith.truncf %49 : vector<32x96xf32> to vector<32x96xbf16>
    %c288 = arith.constant 288 : index
    %c0_21 = arith.constant 0 : index
    %51 = vector.load %arg1[%c288, %c0_21] : memref<672x96xbf16, #tpu.memory_space<vmem>>, vector<96x96xbf16>
    %cst_22 = arith.constant dense<0.000000e+00> : vector<32x96xf32>
    %52 = tpu.matmul %50, %51, %cst_22 {dimension_numbers = #tpu.dot_dimension_numbers<[1], [0], [0], [1], [0, 0, 1, 1], [], []>} : vector<32x96xbf16>, vector<96x96xbf16>, vector<32x96xf32> -> vector<32x96xf32>
    %cst_23 = arith.constant 0.000000e+00 : f32
    %53 = vector.broadcast %cst_23 : f32 to vector<32x96xf32>
    %54 = arith.maximumf %52, %53 : vector<32x96xf32>
    %c1_i32_24 = arith.constant 1 : i32
    %55 = tpu.dynamic_rotate %54 by %c1_i32_24 dim 0 : vector<32x96xf32>, i32 -> vector<32x96xf32>
    %c31_i32_25 = arith.constant 31 : i32
    %56 = tpu.dynamic_rotate %54 by %c31_i32_25 dim 0 : vector<32x96xf32>, i32 -> vector<32x96xf32>
    %57 = arith.mulf %55, %1 : vector<32x96xf32>
    %58 = arith.mulf %54, %2 : vector<32x96xf32>
    %59 = arith.addf %57, %58 : vector<32x96xf32>
    %60 = arith.mulf %56, %3 : vector<32x96xf32>
    %61 = arith.addf %59, %60 : vector<32x96xf32>
    %62 = arith.truncf %61 : vector<32x96xf32> to vector<32x96xbf16>
    %c384 = arith.constant 384 : index
    %c0_26 = arith.constant 0 : index
    %63 = vector.load %arg1[%c384, %c0_26] : memref<672x96xbf16, #tpu.memory_space<vmem>>, vector<96x96xbf16>
    %cst_27 = arith.constant dense<0.000000e+00> : vector<32x96xf32>
    %64 = tpu.matmul %62, %63, %cst_27 {dimension_numbers = #tpu.dot_dimension_numbers<[1], [0], [0], [1], [0, 0, 1, 1], [], []>} : vector<32x96xbf16>, vector<96x96xbf16>, vector<32x96xf32> -> vector<32x96xf32>
    %65 = arith.addf %64, %42 : vector<32x96xf32>
    %cst_28 = arith.constant 0.000000e+00 : f32
    %66 = vector.broadcast %cst_28 : f32 to vector<32x96xf32>
    %67 = arith.maximumf %65, %66 : vector<32x96xf32>
    %68 = arith.addf %67, %15 : vector<32x96xf32>
    %c1_i32_29 = arith.constant 1 : i32
    %69 = tpu.dynamic_rotate %68 by %c1_i32_29 dim 0 : vector<32x96xf32>, i32 -> vector<32x96xf32>
    %c31_i32_30 = arith.constant 31 : i32
    %70 = tpu.dynamic_rotate %68 by %c31_i32_30 dim 0 : vector<32x96xf32>, i32 -> vector<32x96xf32>
    %71 = arith.mulf %69, %1 : vector<32x96xf32>
    %72 = arith.mulf %68, %2 : vector<32x96xf32>
    %73 = arith.addf %71, %72 : vector<32x96xf32>
    %74 = arith.mulf %70, %3 : vector<32x96xf32>
    %75 = arith.addf %73, %74 : vector<32x96xf32>
    %76 = arith.truncf %75 : vector<32x96xf32> to vector<32x96xbf16>
    %c96_31 = arith.constant 96 : index
    %c0_32 = arith.constant 0 : index
    %77 = vector.load %arg1[%c96_31, %c0_32] : memref<672x96xbf16, #tpu.memory_space<vmem>>, vector<96x96xbf16>
    %cst_33 = arith.constant dense<0.000000e+00> : vector<32x96xf32>
    %78 = tpu.matmul %76, %77, %cst_33 {dimension_numbers = #tpu.dot_dimension_numbers<[1], [0], [0], [1], [0, 0, 1, 1], [], []>} : vector<32x96xbf16>, vector<96x96xbf16>, vector<32x96xf32> -> vector<32x96xf32>
    %cst_34 = arith.constant 0.000000e+00 : f32
    %79 = vector.broadcast %cst_34 : f32 to vector<32x96xf32>
    %80 = arith.maximumf %78, %79 : vector<32x96xf32>
    %c1_i32_35 = arith.constant 1 : i32
    %81 = tpu.dynamic_rotate %80 by %c1_i32_35 dim 0 : vector<32x96xf32>, i32 -> vector<32x96xf32>
    %c31_i32_36 = arith.constant 31 : i32
    %82 = tpu.dynamic_rotate %80 by %c31_i32_36 dim 0 : vector<32x96xf32>, i32 -> vector<32x96xf32>
    %83 = arith.mulf %81, %1 : vector<32x96xf32>
    %84 = arith.mulf %80, %2 : vector<32x96xf32>
    %85 = arith.addf %83, %84 : vector<32x96xf32>
    %86 = arith.mulf %82, %3 : vector<32x96xf32>
    %87 = arith.addf %85, %86 : vector<32x96xf32>
    %88 = arith.truncf %87 : vector<32x96xf32> to vector<32x96xbf16>
    %c192_37 = arith.constant 192 : index
    %c0_38 = arith.constant 0 : index
    %89 = vector.load %arg1[%c192_37, %c0_38] : memref<672x96xbf16, #tpu.memory_space<vmem>>, vector<96x96xbf16>
    %cst_39 = arith.constant dense<0.000000e+00> : vector<32x96xf32>
    %90 = tpu.matmul %88, %89, %cst_39 {dimension_numbers = #tpu.dot_dimension_numbers<[1], [0], [0], [1], [0, 0, 1, 1], [], []>} : vector<32x96xbf16>, vector<96x96xbf16>, vector<32x96xf32> -> vector<32x96xf32>
    %91 = arith.addf %90, %68 : vector<32x96xf32>
    %cst_40 = arith.constant 0.000000e+00 : f32
    %92 = vector.broadcast %cst_40 : f32 to vector<32x96xf32>
    %93 = arith.maximumf %91, %92 : vector<32x96xf32>
    %c1_i32_41 = arith.constant 1 : i32
    %94 = tpu.dynamic_rotate %93 by %c1_i32_41 dim 0 : vector<32x96xf32>, i32 -> vector<32x96xf32>
    %c31_i32_42 = arith.constant 31 : i32
    %95 = tpu.dynamic_rotate %93 by %c31_i32_42 dim 0 : vector<32x96xf32>, i32 -> vector<32x96xf32>
    %96 = arith.mulf %94, %1 : vector<32x96xf32>
    %97 = arith.mulf %93, %2 : vector<32x96xf32>
    %98 = arith.addf %96, %97 : vector<32x96xf32>
    %99 = arith.mulf %95, %3 : vector<32x96xf32>
    %100 = arith.addf %98, %99 : vector<32x96xf32>
    %101 = arith.truncf %100 : vector<32x96xf32> to vector<32x96xbf16>
    %c288_43 = arith.constant 288 : index
    %c0_44 = arith.constant 0 : index
    %102 = vector.load %arg1[%c288_43, %c0_44] : memref<672x96xbf16, #tpu.memory_space<vmem>>, vector<96x96xbf16>
    %cst_45 = arith.constant dense<0.000000e+00> : vector<32x96xf32>
    %103 = tpu.matmul %101, %102, %cst_45 {dimension_numbers = #tpu.dot_dimension_numbers<[1], [0], [0], [1], [0, 0, 1, 1], [], []>} : vector<32x96xbf16>, vector<96x96xbf16>, vector<32x96xf32> -> vector<32x96xf32>
    %cst_46 = arith.constant 0.000000e+00 : f32
    %104 = vector.broadcast %cst_46 : f32 to vector<32x96xf32>
    %105 = arith.maximumf %103, %104 : vector<32x96xf32>
    %c1_i32_47 = arith.constant 1 : i32
    %106 = tpu.dynamic_rotate %105 by %c1_i32_47 dim 0 : vector<32x96xf32>, i32 -> vector<32x96xf32>
    %c31_i32_48 = arith.constant 31 : i32
    %107 = tpu.dynamic_rotate %105 by %c31_i32_48 dim 0 : vector<32x96xf32>, i32 -> vector<32x96xf32>
    %108 = arith.mulf %106, %1 : vector<32x96xf32>
    %109 = arith.mulf %105, %2 : vector<32x96xf32>
    %110 = arith.addf %108, %109 : vector<32x96xf32>
    %111 = arith.mulf %107, %3 : vector<32x96xf32>
    %112 = arith.addf %110, %111 : vector<32x96xf32>
    %113 = arith.truncf %112 : vector<32x96xf32> to vector<32x96xbf16>
    %c384_49 = arith.constant 384 : index
    %c0_50 = arith.constant 0 : index
    %114 = vector.load %arg1[%c384_49, %c0_50] : memref<672x96xbf16, #tpu.memory_space<vmem>>, vector<96x96xbf16>
    %cst_51 = arith.constant dense<0.000000e+00> : vector<32x96xf32>
    %115 = tpu.matmul %113, %114, %cst_51 {dimension_numbers = #tpu.dot_dimension_numbers<[1], [0], [0], [1], [0, 0, 1, 1], [], []>} : vector<32x96xbf16>, vector<96x96xbf16>, vector<32x96xf32> -> vector<32x96xf32>
    %116 = arith.addf %115, %93 : vector<32x96xf32>
    %cst_52 = arith.constant 0.000000e+00 : f32
    %117 = vector.broadcast %cst_52 : f32 to vector<32x96xf32>
    %118 = arith.maximumf %116, %117 : vector<32x96xf32>
    %c1_i32_53 = arith.constant 1 : i32
    %119 = tpu.dynamic_rotate %118 by %c1_i32_53 dim 0 : vector<32x96xf32>, i32 -> vector<32x96xf32>
    %c31_i32_54 = arith.constant 31 : i32
    %120 = tpu.dynamic_rotate %118 by %c31_i32_54 dim 0 : vector<32x96xf32>, i32 -> vector<32x96xf32>
    %121 = arith.mulf %119, %1 : vector<32x96xf32>
    %122 = arith.mulf %118, %2 : vector<32x96xf32>
    %123 = arith.addf %121, %122 : vector<32x96xf32>
    %124 = arith.mulf %120, %3 : vector<32x96xf32>
    %125 = arith.addf %123, %124 : vector<32x96xf32>
    %126 = arith.truncf %125 : vector<32x96xf32> to vector<32x96xbf16>
    %c480 = arith.constant 480 : index
    %c0_55 = arith.constant 0 : index
    %127 = vector.load %arg1[%c480, %c0_55] : memref<672x96xbf16, #tpu.memory_space<vmem>>, vector<96x96xbf16>
    %cst_56 = arith.constant dense<0.000000e+00> : vector<32x96xf32>
    %128 = tpu.matmul %126, %127, %cst_56 {dimension_numbers = #tpu.dot_dimension_numbers<[1], [0], [0], [1], [0, 0, 1, 1], [], []>} : vector<32x96xbf16>, vector<96x96xbf16>, vector<32x96xf32> -> vector<32x96xf32>
    %cst_57 = arith.constant 0.000000e+00 : f32
    %129 = vector.broadcast %cst_57 : f32 to vector<32x96xf32>
    %130 = arith.maximumf %128, %129 : vector<32x96xf32>
    %c1_i32_58 = arith.constant 1 : i32
    %131 = tpu.dynamic_rotate %130 by %c1_i32_58 dim 0 : vector<32x96xf32>, i32 -> vector<32x96xf32>
    %c31_i32_59 = arith.constant 31 : i32
    %132 = tpu.dynamic_rotate %130 by %c31_i32_59 dim 0 : vector<32x96xf32>, i32 -> vector<32x96xf32>
    %133 = arith.mulf %131, %1 : vector<32x96xf32>
    %134 = arith.mulf %130, %2 : vector<32x96xf32>
    %135 = arith.addf %133, %134 : vector<32x96xf32>
    %136 = arith.mulf %132, %3 : vector<32x96xf32>
    %137 = arith.addf %135, %136 : vector<32x96xf32>
    %138 = arith.truncf %137 : vector<32x96xf32> to vector<32x96xbf16>
    %c576 = arith.constant 576 : index
    %c0_60 = arith.constant 0 : index
    %139 = vector.load %arg1[%c576, %c0_60] : memref<672x96xbf16, #tpu.memory_space<vmem>>, vector<96x96xbf16>
    %cst_61 = arith.constant dense<0.000000e+00> : vector<32x96xf32>
    %140 = tpu.matmul %138, %139, %cst_61 {dimension_numbers = #tpu.dot_dimension_numbers<[1], [0], [0], [1], [0, 0, 1, 1], [], []>} : vector<32x96xbf16>, vector<96x96xbf16>, vector<32x96xf32> -> vector<32x96xf32>
    %cst_62 = arith.constant 0.000000e+00 : f32
    %141 = vector.broadcast %cst_62 : f32 to vector<32x96xf32>
    %142 = arith.maximumf %140, %141 : vector<32x96xf32>
    %c1_i32_63 = arith.constant 1 : i32
    %143 = tpu.dynamic_rotate %142 by %c1_i32_63 dim 0 : vector<32x96xf32>, i32 -> vector<32x96xf32>
    %c31_i32_64 = arith.constant 31 : i32
    %144 = tpu.dynamic_rotate %142 by %c31_i32_64 dim 0 : vector<32x96xf32>, i32 -> vector<32x96xf32>
    %145 = arith.mulf %143, %1 : vector<32x96xf32>
    %146 = arith.mulf %142, %2 : vector<32x96xf32>
    %147 = arith.addf %145, %146 : vector<32x96xf32>
    %148 = arith.mulf %144, %3 : vector<32x96xf32>
    %149 = arith.addf %147, %148 : vector<32x96xf32>
    %150 = arith.truncf %149 : vector<32x96xf32> to vector<32x96xbf16>
    %c0_65 = arith.constant 0 : index
    %c0_66 = arith.constant 0 : index
    %151 = vector.load %arg2[%c0_65, %c0_66] : memref<96x128xbf16, #tpu.memory_space<vmem>>, vector<96x128xbf16>
    %cst_67 = arith.constant dense<0.000000e+00> : vector<32x128xf32>
    %152 = tpu.matmul %150, %151, %cst_67 {dimension_numbers = #tpu.dot_dimension_numbers<[1], [0], [0], [1], [0, 0, 1, 1], [], []>} : vector<32x96xbf16>, vector<96x128xbf16>, vector<32x128xf32> -> vector<32x128xf32>
    %c0_68 = arith.constant 0 : index
    %c0_69 = arith.constant 0 : index
    %153 = vector.load %arg3[%c0_68, %c0_69] : memref<32x128xf32, #tpu.memory_space<vmem>>, vector<32x128xf32>
    tpu.vector_store %arg3[%c0_68, %c0_69], %152 {strides = array<i32>} : memref<32x128xf32, #tpu.memory_space<vmem>>, vector<32x128xf32>,
    return
  }
}

</mosaic_0001>

<llo_original>
// kernel: tpu_custom_call.1
$region0: #{tpu_custom_call.1}
  #allocation0 [shape = 'u32[]', space=smem, size = 0x4, offset = 0x4, fixed_abs, tag = 'smem constant byte address 0x4 - core index']
  #allocation1 [shape = 'u32[144,128]{1,0:T(1,128)}', space=vmem, size = 0x12000, scoped, tag = 'internal scratch']
  %s0 = inlined_call_operand.vmem [shape: f32[128,96], index: 0, kind: input, shape index: {}]
  %s1 = inlined_call_operand.vmem [shape: bf16[672,96], index: 1, kind: input, shape index: {}]
  %s2 = inlined_call_operand.vmem [shape: bf16[96,128], index: 2, kind: input, shape index: {}]
  %s3 = inlined_call_operand.hbm [shape: f32[32,128], index: 3, kind: output, shape index: {}]
  %s4 = sld [smem:[#allocation0]]
  $region22: #{tpu_custom_call.1} parent=0
    _
  %s6 = ssub.s32 1, %s4
  %s7 = scalar_select 0, %s6, %s4
  $region1: #{tpu_custom_call.1} parent=0
    #allocation2 [shape = 'u8[16384]{0}', space=vmem, size = 0x4000, scoped, tag = 'output window, operand 0, single buffered']
    #allocation3 [shape = 's32[1]{0}', space=sflag, size = 0x4, scoped, tag = 'scoped memory for tpu_custom_call.1']
    %8 = vsyncpa [#allocation3], 0
    // Predicated region
    $region2: #{tpu_custom_call.1} parent=1 // pred_check
      _
    $region3: #{tpu_custom_call.1} parent=1 // pred_check_branch
      %10 = sbr.rel (0) target = $region5
    $region4: #{tpu_custom_call.1} parent=1 // pred_region
      _
    $region5: #{tpu_custom_call.1} parent=1 // pred_fallthru
      _
    // Predicated region
    $region6: #{tpu_custom_call.1} parent=1 // pred_check
      _
    $region7: #{tpu_custom_call.1} parent=1 // pred_check_branch
      %12 = sbr.rel (0) target = $region9
    $region8: #{tpu_custom_call.1} parent=1 // pred_region
      _
    $region9: #{tpu_custom_call.1} parent=1 // pred_fallthru
      _
    // Predicated region
    $region10: #{tpu_custom_call.1} parent=1 // pred_check
      _
    $region11: #{tpu_custom_call.1} parent=1 // pred_check_branch
      %14 = sbr.rel (0) target = $region13
    $region12: #{tpu_custom_call.1} parent=1 // pred_region
      _
    $region13: #{tpu_custom_call.1} parent=1 // pred_fallthru
      _
    %v16 = vld [vmem:[%s0] sm:$0xff]
    %v17 = vld [vmem:[%s0 + $0x8] sm:$0xff]
    %v18 = vld [vmem:[%s0 + $0x10] sm:$0xff]
    %v19 = vld [vmem:[%s0 + $0x18] sm:$0xff]
    %v20 = vld [vmem:[%s0 + $0x20] sm:$0xff]
    %v21 = vld [vmem:[%s0 + $0x28] sm:$0xff]
    %v22 = vld [vmem:[%s0 + $0x30] sm:$0xff]
    %v23 = vld [vmem:[%s0 + $0x38] sm:$0xff]
    %v24 = vld [vmem:[%s0 + $0x40] sm:$0xff]
    %v25 = vld [vmem:[%s0 + $0x48] sm:$0xff]
    %v26 = vld [vmem:[%s0 + $0x50] sm:$0xff]
    %v27 = vld [vmem:[%s0 + $0x58] sm:$0xff]
    %v28 = vld [vmem:[%s0 + $0x60] sm:$0xff]
    %v29 = vld [vmem:[%s0 + $0x68] sm:$0xff]
    %v30 = vld [vmem:[%s0 + $0x70] sm:$0xff]
    %v31 = vld [vmem:[%s0 + $0x78] sm:$0xff]
    %v32 = vrot.slane %v16, 7
    %v33 = vrot.slane %v17, 7
    %v34 = vrot.slane %v18, 7
    %v35 = vrot.slane %v19, 7
    %v36 = vlaneseq
    %v37 = vshrl.u32 %v36, 7
    %vm38 = vcmp.lt.s32.totalorder %v37, 1
    %v39 = vsel %vm38, %v34, %v35
    %v40 = vsel %vm38, %v33, %v34
    %v41 = vsel %vm38, %v32, %v33
    %v42 = vsel %vm38, %v35, %v32
    %v43 = vrot.slane %v16, 1
    %v44 = vrot.slane %v17, 1
    %v45 = vrot.slane %v18, 1
    %v46 = vrot.slane %v19, 1
    %vm47 = vcmp.lt.s32.totalorder %v37, 7
    %v48 = vsel %vm47, %v45, %v46
    %v49 = vsel %vm47, %v44, %v45
    %v50 = vsel %vm47, %v43, %v44
    %v51 = vsel %vm47, %v46, %v43
    %v52 = vmul.f32 %v42, %v20
    %v53 = vmul.f32 %v41, %v21
    %v54 = vmul.f32 %v40, %v22
    %v55 = vmul.f32 %v39, %v23
    %v56 = vmul.f32 %v16, %v24
    %v57 = vmul.f32 %v17, %v25
    %v58 = vmul.f32 %v18, %v26
    %v59 = vmul.f32 %v19, %v27
    %v60 = vadd.f32 %v52, %v56
    %v61 = vadd.f32 %v53, %v57
    %v62 = vadd.f32 %v54, %v58
    %v63 = vadd.f32 %v55, %v59
    %v64 = vmul.f32 %v50, %v28
    %v65 = vmul.f32 %v49, %v29
    %v66 = vmul.f32 %v48, %v30
    %v67 = vmul.f32 %v51, %v31
    %v68 = vadd.f32 %v60, %v64
    %v69 = vadd.f32 %v61, %v65
    %v70 = vadd.f32 %v62, %v66
    %v71 = vadd.f32 %v63, %v67
    %v72 = vpack.c.bf16 %v69, %v68
    %v73 = vpack.c.bf16 %v71, %v70
    %v74 = vld [vmem:[%s1] sm:$0xf]
    %v75 = vld [vmem:[%s1 + $0x4] sm:$0xf]
    %v76 = vld [vmem:[%s1 + $0x8] sm:$0xf]
    %v77 = vld [vmem:[%s1 + $0xc] sm:$0xf]
    %v78 = vld [vmem:[%s1 + $0x10] sm:$0xf]
    %v79 = vld [vmem:[%s1 + $0x14] sm:$0xf]
    %v80 = vld [vmem:[%s1 + $0x18] sm:$0xf]
    %v81 = vld [vmem:[%s1 + $0x1c] sm:$0xf]
    %v82 = vld [vmem:[%s1 + $0x20] sm:$0xf]
    %v83 = vld [vmem:[%s1 + $0x24] sm:$0xf]
    %v84 = vld [vmem:[%s1 + $0x28] sm:$0xf]
    %v85 = vld [vmem:[%s1 + $0x2c] sm:$0xf]
    %v98 = vunpack.c.l.b16 %v74
    %v99 = vunpack.c.l.b16 %v75
    %v100 = vunpack.c.l.b16 %v76
    %v101 = vunpack.c.l.b16 %v77
    %v102 = vunpack.c.l.b16 %v78
    %v103 = vunpack.c.l.b16 %v79
    %v104 = vunpack.c.l.b16 %v80
    %v105 = vunpack.c.l.b16 %v81
    %v106 = vunpack.c.l.b16 %v82
    %v107 = vunpack.c.l.b16 %v83
    %v108 = vunpack.c.l.b16 %v84
    %v109 = vunpack.c.l.b16 %v85
    %v110 = vpack.c.b16 %v99, %v98
    %v111 = vpack.c.b16 %v101, %v100
    %v112 = vpack.c.b16 %v103, %v102
    %v113 = vpack.c.b16 %v105, %v104
    %v114 = vpack.c.b16 %v107, %v106
    %v115 = vpack.c.b16 %v109, %v108
    %vm122 = vcmask 785408
    %v124 = vsel %vm122, %v72, 0
    %v127 = vsel %vm122, %v73, 0
    %129 = vmatprep.subr.bf16.mxu0 0
    %130 = vmatpush1.bf16.msra.mxu0 %v110
    %131 = vmatprep.subr.bf16.mxu0 0
    %132 = vmatpush1.bf16.msra.mxu0 %v111
    %133 = vmatprep.subr.bf16.mxu0 0
    %134 = vmatpush1.bf16.msra.mxu0 %v112
    %135 = vmatprep.subr.bf16.mxu0 0
    %136 = vmatpush1.bf16.msra.mxu0 %v113
    %137 = vmatprep.subr.bf16.mxu0 0
    %138 = vmatpush1.bf16.msra.mxu0 %v114
    %139 = vmatprep.subr.bf16.mxu0 0
    %140 = vmatpush1.bf16.msra.mxu0 %v115
    %141 = vmatprep.subr.bf16.mxu0 0
    %142 = vmatpush1.bf16.msra.mxu0 0
    %143 = vmatprep.subr.bf16.mxu0 0
    %144 = vmatpush1.bf16.msra.mxu0 0
    %145 = vmatprep.subr.bf16.mxu0 0
    %146 = vmatpush1.bf16.msra.mxu0 0
    %147 = vmatprep.subr.bf16.mxu0 0
    %148 = vmatpush1.bf16.msra.mxu0 0
    %149 = vmatprep.subr.bf16.mxu0 0
    %150 = vmatpush1.bf16.msra.mxu0 0
    %151 = vmatprep.subr.bf16.mxu0 0
    %152 = vmatpush1.bf16.msra.mxu0 0
    %153 = vmatprep.subr.bf16.mxu0 0
    %154 = vmatpush1.bf16.msra.mxu0 0
    %155 = vmatprep.subr.bf16.mxu0 0
    %156 = vmatpush1.bf16.msra.mxu0 0
    %157 = vmatprep.subr.bf16.mxu0 0
    %158 = vmatpush1.bf16.msra.mxu0 0
    %159 = vmatprep.subr.bf16.mxu0 0
    %160 = vmatpush1.bf16.msra.mxu0 0
    %161 = vmatprep.mubr.bf16.mxu0 0
    %162 = vmatmul.mubr.bf16.gmra.mrb[0].mxu0 %v124
    %v163 = vpop.f32.mrb[0].mxu0
    %v164 = vadd.f32 0.0, %v163
    %v165 = vpop.f32.mrb[0].mxu0
    %v166 = vpop.f32.mrb[0].mxu0
    %v167 = vadd.f32 0.0, %v166
    %v168 = vpop.f32.mrb[0].mxu0
    %169 = vmatprep.mubr.bf16.mxu0 0
    %170 = vmatmul.mubr.bf16.gmra.mrb[0].mxu0 %v127
    %v171 = vpop.f32.mrb[0].mxu0
    %v172 = vadd.f32 0.0, %v171
    %v173 = vpop.f32.mrb[0].mxu0
    %v174 = vpop.f32.mrb[0].mxu0
    %v175 = vadd.f32 0.0, %v174
    %v176 = vpop.f32.mrb[0].mxu0
    %177 = vdwg.mxu0
    %v178 = vmax.f32 %v164, 0.0
    %v179 = vmax.f32 %v167, 0.0
    %v180 = vmax.f32 %v172, 0.0
    %v181 = vmax.f32 %v175, 0.0
    %v182 = vadd.f32 %v178, 0.0
    %v183 = vadd.f32 %v179, 0.0
    %v184 = vadd.f32 %v180, 0.0
    %v185 = vadd.f32 %v181, 0.0
    %v186 = vrot.slane %v182, 7
    %v187 = vrot.slane %v183, 7
    %v188 = vrot.slane %v184, 7
    %v189 = vrot.slane %v185, 7
    %v190 = vsel %vm38, %v188, %v189
    %v191 = vsel %vm38, %v187, %v188
    %v192 = vsel %vm38, %v186, %v187
    %v193 = vsel %vm38, %v189, %v186
    %v194 = vrot.slane %v182, 1
    %v195 = vrot.slane %v183, 1
    %v196 = vrot.slane %v184, 1
    %v197 = vrot.slane %v185, 1
    %v198 = vsel %vm47, %v196, %v197
    %v199 = vsel %vm47, %v195, %v196
    %v200 = vsel %vm47, %v194, %v195
    %v201 = vsel %vm47, %v197, %v194
    %v202 = vmul.f32 %v193, %v20
    %v203 = vmul.f32 %v192, %v21
    %v204 = vmul.f32 %v191, %v22
    %v205 = vmul.f32 %v190, %v23
    %v206 = vmul.f32 %v182, %v24
    %v207 = vmul.f32 %v183, %v25
    %v208 = vmul.f32 %v184, %v26
    %v209 = vmul.f32 %v185, %v27
    %v210 = vadd.f32 %v202, %v206
    %v211 = vadd.f32 %v203, %v207
    %v212 = vadd.f32 %v204, %v208
    %v213 = vadd.f32 %v205, %v209
    %v214 = vmul.f32 %v200, %v28
    %v215 = vmul.f32 %v199, %v29
    %v216 = vmul.f32 %v198, %v30
    %v217 = vmul.f32 %v201, %v31
    %v218 = vadd.f32 %v210, %v214
    %v219 = vadd.f32 %v211, %v215
    %v220 = vadd.f32 %v212, %v216
    %v221 = vadd.f32 %v213, %v217
    %v222 = vpack.c.bf16 %v219, %v218
    %v223 = vpack.c.bf16 %v221, %v220
    %v224 = vld [vmem:[%s1 + $0x30] sm:$0xf]
    %v225 = vld [vmem:[%s1 + $0x34] sm:$0xf]
    %v226 = vld [vmem:[%s1 + $0x38] sm:$0xf]
    %v227 = vld [vmem:[%s1 + $0x3c] sm:$0xf]
    %v228 = vld [vmem:[%s1 + $0x40] sm:$0xf]
    %v229 = vld [vmem:[%s1 + $0x44] sm:$0xf]
    %v230 = vld [vmem:[%s1 + $0x48] sm:$0xf]
    %v231 = vld [vmem:[%s1 + $0x4c] sm:$0xf]
    %v232 = vld [vmem:[%s1 + $0x50] sm:$0xf]
    %v233 = vld [vmem:[%s1 + $0x54] sm:$0xf]
    %v234 = vld [vmem:[%s1 + $0x58] sm:$0xf]
    %v235 = vld [vmem:[%s1 + $0x5c] sm:$0xf]
    %v248 = vunpack.c.l.b16 %v224
    %v249 = vunpack.c.l.b16 %v225
    %v250 = vunpack.c.l.b16 %v226
    %v251 = vunpack.c.l.b16 %v227
    %v252 = vunpack.c.l.b16 %v228
    %v253 = vunpack.c.l.b16 %v229
    %v254 = vunpack.c.l.b16 %v230
    %v255 = vunpack.c.l.b16 %v231
    %v256 = vunpack.c.l.b16 %v232
    %v257 = vunpack.c.l.b16 %v233
    %v258 = vunpack.c.l.b16 %v234
    %v259 = vunpack.c.l.b16 %v235
    %v260 = vpack.c.b16 %v249, %v248
    %v261 = vpack.c.b16 %v251, %v250
    %v262 = vpack.c.b16 %v253, %v252
    %v263 = vpack.c.b16 %v255, %v254
    %v264 = vpack.c.b16 %v257, %v256
    %v265 = vpack.c.b16 %v259, %v258
    %v273 = vsel %vm122, %v222, 0
    %v276 = vsel %vm122, %v223, 0
    %278 = vmatprep.subr.bf16.mxu0 0
    %279 = vmatpush1.bf16.msra.mxu0 %v260
    %280 = vmatprep.subr.bf16.mxu0 0
    %281 = vmatpush1.bf16.msra.mxu0 %v261
    %282 = vmatprep.subr.bf16.mxu0 0
    %283 = vmatpush1.bf16.msra.mxu0 %v262
    %284 = vmatprep.subr.bf16.mxu0 0
    %285 = vmatpush1.bf16.msra.mxu0 %v263
    %286 = vmatprep.subr.bf16.mxu0 0
    %287 = vmatpush1.bf16.msra.mxu0 %v264
    %288 = vmatprep.subr.bf16.mxu0 0
    %289 = vmatpush1.bf16.msra.mxu0 %v265
    %290 = vmatprep.subr.bf16.mxu0 0
    %291 = vmatpush1.bf16.msra.mxu0 0
    %292 = vmatprep.subr.bf16.mxu0 0
    %293 = vmatpush1.bf16.msra.mxu0 0
    %294 = vmatprep.subr.bf16.mxu0 0
    %295 = vmatpush1.bf16.msra.mxu0 0
    %296 = vmatprep.subr.bf16.mxu0 0
    %297 = vmatpush1.bf16.msra.mxu0 0
    %298 = vmatprep.subr.bf16.mxu0 0
    %299 = vmatpush1.bf16.msra.mxu0 0
    %300 = vmatprep.subr.bf16.mxu0 0
    %301 = vmatpush1.bf16.msra.mxu0 0
    %302 = vmatprep.subr.bf16.mxu0 0
    %303 = vmatpush1.bf16.msra.mxu0 0
    %304 = vmatprep.subr.bf16.mxu0 0
    %305 = vmatpush1.bf16.msra.mxu0 0
    %306 = vmatprep.subr.bf16.mxu0 0
    %307 = vmatpush1.bf16.msra.mxu0 0
    %308 = vmatprep.subr.bf16.mxu0 0
    %309 = vmatpush1.bf16.msra.mxu0 0
    %310 = vmatprep.mubr.bf16.mxu0 0
    %311 = vmatmul.mubr.bf16.gmra.mrb[0].mxu0 %v273
    %v312 = vpop.f32.mrb[0].mxu0
    %v313 = vadd.f32 0.0, %v312
    %v314 = vpop.f32.mrb[0].mxu0
    %v315 = vpop.f32.mrb[0].mxu0
    %v316 = vadd.f32 0.0, %v315
    %v317 = vpop.f32.mrb[0].mxu0
    %318 = vmatprep.mubr.bf16.mxu0 0
    %319 = vmatmul.mubr.bf16.gmra.mrb[0].mxu0 %v276
    %v320 = vpop.f32.mrb[0].mxu0
    %v321 = vadd.f32 0.0, %v320
    %v322 = vpop.f32.mrb[0].mxu0
    %v323 = vpop.f32.mrb[0].mxu0
    %v324 = vadd.f32 0.0, %v323
    %v325 = vpop.f32.mrb[0].mxu0
    %326 = vdwg.mxu0
    %v327 = vmax.f32 %v313, 0.0
    %v328 = vmax.f32 %v316, 0.0
    %v329 = vmax.f32 %v321, 0.0
    %v330 = vmax.f32 %v324, 0.0
    %v331 = vrot.slane %v327, 7
    %v332 = vrot.slane %v328, 7
    %v333 = vrot.slane %v329, 7
    %v334 = vrot.slane %v330, 7
    %v335 = vsel %vm38, %v333, %v334
    %v336 = vsel %vm38, %v332, %v333
    %v337 = vsel %vm38, %v331, %v332
    %v338 = vsel %vm38, %v334, %v331
    %v339 = vrot.slane %v327, 1
    %v340 = vrot.slane %v328, 1
    %v341 = vrot.slane %v329, 1
    %v342 = vrot.slane %v330, 1
    %v343 = vsel %vm47, %v341, %v342
    %v344 = vsel %vm47, %v340, %v341
    %v345 = vsel %vm47, %v339, %v340
    %v346 = vsel %vm47, %v342, %v339
    %v347 = vmul.f32 %v338, %v20
    %v348 = vmul.f32 %v337, %v21
    %v349 = vmul.f32 %v336, %v22
    %v350 = vmul.f32 %v335, %v23
    %v351 = vmul.f32 %v327, %v24
    %v352 = vmul.f32 %v328, %v25
    %v353 = vmul.f32 %v329, %v26
    %v354 = vmul.f32 %v330, %v27
    %v355 = vadd.f32 %v347, %v351
    %v356 = vadd.f32 %v348, %v352
    %v357 = vadd.f32 %v349, %v353
    %v358 = vadd.f32 %v350, %v354
    %v359 = vmul.f32 %v345, %v28
    %v360 = vmul.f32 %v344, %v29
    %v361 = vmul.f32 %v343, %v30
    %v362 = vmul.f32 %v346, %v31
    %v363 = vadd.f32 %v355, %v359
    %v364 = vadd.f32 %v356, %v360
    %v365 = vadd.f32 %v357, %v361
    %v366 = vadd.f32 %v358, %v362
    %v367 = vpack.c.bf16 %v364, %v363
    %v368 = vpack.c.bf16 %v366, %v365
    %v369 = vld [vmem:[%s1 + $0x60] sm:$0xf]
    %v370 = vld [vmem:[%s1 + $0x64] sm:$0xf]
    %v371 = vld [vmem:[%s1 + $0x68] sm:$0xf]
    %v372 = vld [vmem:[%s1 + $0x6c] sm:$0xf]
    %v373 = vld [vmem:[%s1 + $0x70] sm:$0xf]
    %v374 = vld [vmem:[%s1 + $0x74] sm:$0xf]
    %v375 = vld [vmem:[%s1 + $0x78] sm:$0xf]
    %v376 = vld [vmem:[%s1 + $0x7c] sm:$0xf]
    %v377 = vld [vmem:[%s1 + $0x80] sm:$0xf]
    %v378 = vld [vmem:[%s1 + $0x84] sm:$0xf]
    %v379 = vld [vmem:[%s1 + $0x88] sm:$0xf]
    %v380 = vld [vmem:[%s1 + $0x8c] sm:$0xf]
    %v393 = vunpack.c.l.b16 %v369
    %v394 = vunpack.c.l.b16 %v370
    %v395 = vunpack.c.l.b16 %v371
    %v396 = vunpack.c.l.b16 %v372
    %v397 = vunpack.c.l.b16 %v373
    %v398 = vunpack.c.l.b16 %v374
    %v399 = vunpack.c.l.b16 %v375
    %v400 = vunpack.c.l.b16 %v376
    %v401 = vunpack.c.l.b16 %v377
    %v402 = vunpack.c.l.b16 %v378
    %v403 = vunpack.c.l.b16 %v379
    %v404 = vunpack.c.l.b16 %v380
    %v405 = vpack.c.b16 %v394, %v393
    %v406 = vpack.c.b16 %v396, %v395
    %v407 = vpack.c.b16 %v398, %v397
    %v408 = vpack.c.b16 %v400, %v399
    %v409 = vpack.c.b16 %v402, %v401
    %v410 = vpack.c.b16 %v404, %v403
    %v418 = vsel %vm122, %v367, 0
    %v421 = vsel %vm122, %v368, 0
    %423 = vmatprep.subr.bf16.mxu0 0
    %424 = vmatpush1.bf16.msra.mxu0 %v405
    %425 = vmatprep.subr.bf16.mxu0 0
    %426 = vmatpush1.bf16.msra.mxu0 %v406
    %427 = vmatprep.subr.bf16.mxu0 0
    %428 = vmatpush1.bf16.msra.mxu0 %v407
    %429 = vmatprep.subr.bf16.mxu0 0
    %430 = vmatpush1.bf16.msra.mxu0 %v408
    %431 = vmatprep.subr.bf16.mxu0 0
    %432 = vmatpush1.bf16.msra.mxu0 %v409
    %433 = vmatprep.subr.bf16.mxu0 0
    %434 = vmatpush1.bf16.msra.mxu0 %v410
    %435 = vmatprep.subr.bf16.mxu0 0
    %436 = vmatpush1.bf16.msra.mxu0 0
    %437 = vmatprep.subr.bf16.mxu0 0
    %438 = vmatpush1.bf16.msra.mxu0 0
    %439 = vmatprep.subr.bf16.mxu0 0
    %440 = vmatpush1.bf16.msra.mxu0 0
    %441 = vmatprep.subr.bf16.mxu0 0
    %442 = vmatpush1.bf16.msra.mxu0 0
    %443 = vmatprep.subr.bf16.mxu0 0
    %444 = vmatpush1.bf16.msra.mxu0 0
    %445 = vmatprep.subr.bf16.mxu0 0
    %446 = vmatpush1.bf16.msra.mxu0 0
    %447 = vmatprep.subr.bf16.mxu0 0
    %448 = vmatpush1.bf16.msra.mxu0 0
    %449 = vmatprep.subr.bf16.mxu0 0
    %450 = vmatpush1.bf16.msra.mxu0 0
    %451 = vmatprep.subr.bf16.mxu0 0
    %452 = vmatpush1.bf16.msra.mxu0 0
    %453 = vmatprep.subr.bf16.mxu0 0
    %454 = vmatpush1.bf16.msra.mxu0 0
    %455 = vmatprep.mubr.bf16.mxu0 0
    %456 = vmatmul.mubr.bf16.gmra.mrb[0].mxu0 %v418
    %v457 = vpop.f32.mrb[0].mxu0
    %v458 = vadd.f32 %v182, %v457
    %v459 = vpop.f32.mrb[0].mxu0
    %v460 = vpop.f32.mrb[0].mxu0
    %v461 = vadd.f32 %v183, %v460
    %v462 = vpop.f32.mrb[0].mxu0
    %463 = vmatprep.mubr.bf16.mxu0 0
    %464 = vmatmul.mubr.bf16.gmra.mrb[0].mxu0 %v421
    %v465 = vpop.f32.mrb[0].mxu0
    %v466 = vadd.f32 %v184, %v465
    %v467 = vpop.f32.mrb[0].mxu0
    %v468 = vpop.f32.mrb[0].mxu0
    %v469 = vadd.f32 %v185, %v468
    %v470 = vpop.f32.mrb[0].mxu0
    %471 = vdwg.mxu0
    %v472 = vmax.f32 %v458, 0.0
    %v473 = vmax.f32 %v461, 0.0
    %v474 = vmax.f32 %v466, 0.0
    %v475 = vmax.f32 %v469, 0.0
    %v476 = vrot.slane %v472, 7
    %v477 = vrot.slane %v473, 7
    %v478 = vrot.slane %v474, 7
    %v479 = vrot.slane %v475, 7
    %v480 = vsel %vm38, %v478, %v479
    %v481 = vsel %vm38, %v477, %v478
    %v482 = vsel %vm38, %v476, %v477
    %v483 = vsel %vm38, %v479, %v476
    %v484 = vrot.slane %v472, 1
    %v485 = vrot.slane %v473, 1
    %v486 = vrot.slane %v474, 1
    %v487 = vrot.slane %v475, 1
    %v488 = vsel %vm47, %v486, %v487
    %v489 = vsel %vm47, %v485, %v486
    %v490 = vsel %vm47, %v484, %v485
    %v491 = vsel %vm47, %v487, %v484
    %v492 = vmul.f32 %v483, %v20
    %v493 = vmul.f32 %v482, %v21
    %v494 = vmul.f32 %v481, %v22
    %v495 = vmul.f32 %v480, %v23
    %v496 = vmul.f32 %v472, %v24
    %v497 = vmul.f32 %v473, %v25
    %v498 = vmul.f32 %v474, %v26
    %v499 = vmul.f32 %v475, %v27
    %v500 = vadd.f32 %v492, %v496
    %v501 = vadd.f32 %v493, %v497
    %v502 = vadd.f32 %v494, %v498
    %v503 = vadd.f32 %v495, %v499
    %v504 = vmul.f32 %v490, %v28
    %v505 = vmul.f32 %v489, %v29
    %v506 = vmul.f32 %v488, %v30
    %v507 = vmul.f32 %v491, %v31
    %v508 = vadd.f32 %v500, %v504
    %v509 = vadd.f32 %v501, %v505
    %v510 = vadd.f32 %v502, %v506
    %v511 = vadd.f32 %v503, %v507
    %v512 = vpack.c.bf16 %v509, %v508
    %v513 = vpack.c.bf16 %v511, %v510
    %v514 = vld [vmem:[%s1 + $0x90] sm:$0xf]
    %v515 = vld [vmem:[%s1 + $0x94] sm:$0xf]
    %v516 = vld [vmem:[%s1 + $0x98] sm:$0xf]
    %v517 = vld [vmem:[%s1 + $0x9c] sm:$0xf]
    %v518 = vld [vmem:[%s1 + $0xa0] sm:$0xf]
    %v519 = vld [vmem:[%s1 + $0xa4] sm:$0xf]
    %v520 = vld [vmem:[%s1 + $0xa8] sm:$0xf]
    %v521 = vld [vmem:[%s1 + $0xac] sm:$0xf]
    %v522 = vld [vmem:[%s1 + $0xb0] sm:$0xf]
    %v523 = vld [vmem:[%s1 + $0xb4] sm:$0xf]
    %v524 = vld [vmem:[%s1 + $0xb8] sm:$0xf]
    %v525 = vld [vmem:[%s1 + $0xbc] sm:$0xf]
    %v538 = vunpack.c.l.b16 %v514
    %v539 = vunpack.c.l.b16 %v515
    %v540 = vunpack.c.l.b16 %v516
    %v541 = vunpack.c.l.b16 %v517
    %v542 = vunpack.c.l.b16 %v518
    %v543 = vunpack.c.l.b16 %v519
    %v544 = vunpack.c.l.b16 %v520
    %v545 = vunpack.c.l.b16 %v521
    %v546 = vunpack.c.l.b16 %v522
    %v547 = vunpack.c.l.b16 %v523
    %v548 = vunpack.c.l.b16 %v524
    %v549 = vunpack.c.l.b16 %v525
    %v550 = vpack.c.b16 %v539, %v538
    %v551 = vpack.c.b16 %v541, %v540
    %v552 = vpack.c.b16 %v543, %v542
    %v553 = vpack.c.b16 %v545, %v544
    %v554 = vpack.c.b16 %v547, %v546
    %v555 = vpack.c.b16 %v549, %v548
    %v563 = vsel %vm122, %v512, 0
    %v566 = vsel %vm122, %v513, 0
    %568 = vmatprep.subr.bf16.mxu0 0
    %569 = vmatpush1.bf16.msra.mxu0 %v550
    %570 = vmatprep.subr.bf16.mxu0 0
    %571 = vmatpush1.bf16.msra.mxu0 %v551
    %572 = vmatprep.subr.bf16.mxu0 0
    %573 = vmatpush1.bf16.msra.mxu0 %v552
    %574 = vmatprep.subr.bf16.mxu0 0
    %575 = vmatpush1.bf16.msra.mxu0 %v553
    %576 = vmatprep.subr.bf16.mxu0 0
    %577 = vmatpush1.bf16.msra.mxu0 %v554
    %578 = vmatprep.subr.bf16.mxu0 0
    %579 = vmatpush1.bf16.msra.mxu0 %v555
    %580 = vmatprep.subr.bf16.mxu0 0
    %581 = vmatpush1.bf16.msra.mxu0 0
    %582 = vmatprep.subr.bf16.mxu0 0
    %583 = vmatpush1.bf16.msra.mxu0 0
    %584 = vmatprep.subr.bf16.mxu0 0
    %585 = vmatpush1.bf16.msra.mxu0 0
    %586 = vmatprep.subr.bf16.mxu0 0
    %587 = vmatpush1.bf16.msra.mxu0 0
    %588 = vmatprep.subr.bf16.mxu0 0
    %589 = vmatpush1.bf16.msra.mxu0 0
    %590 = vmatprep.subr.bf16.mxu0 0
    %591 = vmatpush1.bf16.msra.mxu0 0
    %592 = vmatprep.subr.bf16.mxu0 0
    %593 = vmatpush1.bf16.msra.mxu0 0
    %594 = vmatprep.subr.bf16.mxu0 0
    %595 = vmatpush1.bf16.msra.mxu0 0
    %596 = vmatprep.subr.bf16.mxu0 0
    %597 = vmatpush1.bf16.msra.mxu0 0
    %598 = vmatprep.subr.bf16.mxu0 0
    %599 = vmatpush1.bf16.msra.mxu0 0
    %600 = vmatprep.mubr.bf16.mxu0 0
    %601 = vmatmul.mubr.bf16.gmra.mrb[0].mxu0 %v563
    %v602 = vpop.f32.mrb[0].mxu0
    %v603 = vadd.f32 0.0, %v602
    %v604 = vpop.f32.mrb[0].mxu0
    %v605 = vpop.f32.mrb[0].mxu0
    %v606 = vadd.f32 0.0, %v605
    %v607 = vpop.f32.mrb[0].mxu0
    %608 = vmatprep.mubr.bf16.mxu0 0
    %609 = vmatmul.mubr.bf16.gmra.mrb[0].mxu0 %v566
    %v610 = vpop.f32.mrb[0].mxu0
    %v611 = vadd.f32 0.0, %v610
    %v612 = vpop.f32.mrb[0].mxu0
    %v613 = vpop.f32.mrb[0].mxu0
    %v614 = vadd.f32 0.0, %v613
    %v615 = vpop.f32.mrb[0].mxu0
    %616 = vdwg.mxu0
    %v617 = vmax.f32 %v603, 0.0
    %v618 = vmax.f32 %v606, 0.0
    %v619 = vmax.f32 %v611, 0.0
    %v620 = vmax.f32 %v614, 0.0
    %v621 = vrot.slane %v617, 7
    %v622 = vrot.slane %v618, 7
    %v623 = vrot.slane %v619, 7
    %v624 = vrot.slane %v620, 7
    %v625 = vsel %vm38, %v623, %v624
    %v626 = vsel %vm38, %v622, %v623
    %v627 = vsel %vm38, %v621, %v622
    %v628 = vsel %vm38, %v624, %v621
    %v629 = vrot.slane %v617, 1
    %v630 = vrot.slane %v618, 1
    %v631 = vrot.slane %v619, 1
    %v632 = vrot.slane %v620, 1
    %v633 = vsel %vm47, %v631, %v632
    %v634 = vsel %vm47, %v630, %v631
    %v635 = vsel %vm47, %v629, %v630
    %v636 = vsel %vm47, %v632, %v629
    %v637 = vmul.f32 %v628, %v20
    %v638 = vmul.f32 %v627, %v21
    %v639 = vmul.f32 %v626, %v22
    %v640 = vmul.f32 %v625, %v23
    %v641 = vmul.f32 %v617, %v24
    %v642 = vmul.f32 %v618, %v25
    %v643 = vmul.f32 %v619, %v26
    %v644 = vmul.f32 %v620, %v27
    %v645 = vadd.f32 %v637, %v641
    %v646 = vadd.f32 %v638, %v642
    %v647 = vadd.f32 %v639, %v643
    %v648 = vadd.f32 %v640, %v644
    %v649 = vmul.f32 %v635, %v28
    %v650 = vmul.f32 %v634, %v29
    %v651 = vmul.f32 %v633, %v30
    %v652 = vmul.f32 %v636, %v31
    %v653 = vadd.f32 %v645, %v649
    %v654 = vadd.f32 %v646, %v650
    %v655 = vadd.f32 %v647, %v651
    %v656 = vadd.f32 %v648, %v652
    %v657 = vpack.c.bf16 %v654, %v653
    %v658 = vpack.c.bf16 %v656, %v655
    %v659 = vld [vmem:[%s1 + $0xc0] sm:$0xf]
    %v660 = vld [vmem:[%s1 + $0xc4] sm:$0xf]
    %v661 = vld [vmem:[%s1 + $0xc8] sm:$0xf]
    %v662 = vld [vmem:[%s1 + $0xcc] sm:$0xf]
    %v663 = vld [vmem:[%s1 + $0xd0] sm:$0xf]
    %v664 = vld [vmem:[%s1 + $0xd4] sm:$0xf]
    %v665 = vld [vmem:[%s1 + $0xd8] sm:$0xf]
    %v666 = vld [vmem:[%s1 + $0xdc] sm:$0xf]
    %v667 = vld [vmem:[%s1 + $0xe0] sm:$0xf]
    %v668 = vld [vmem:[%s1 + $0xe4] sm:$0xf]
    %v669 = vld [vmem:[%s1 + $0xe8] sm:$0xf]
    %v670 = vld [vmem:[%s1 + $0xec] sm:$0xf]
    %v683 = vunpack.c.l.b16 %v659
    %v684 = vunpack.c.l.b16 %v660
    %v685 = vunpack.c.l.b16 %v661
    %v686 = vunpack.c.l.b16 %v662
    %v687 = vunpack.c.l.b16 %v663
    %v688 = vunpack.c.l.b16 %v664
    %v689 = vunpack.c.l.b16 %v665
    %v690 = vunpack.c.l.b16 %v666
    %v691 = vunpack.c.l.b16 %v667
    %v692 = vunpack.c.l.b16 %v668
    %v693 = vunpack.c.l.b16 %v669
    %v694 = vunpack.c.l.b16 %v670
    %v695 = vpack.c.b16 %v684, %v683
    %v696 = vpack.c.b16 %v686, %v685
    %v697 = vpack.c.b16 %v688, %v687
    %v698 = vpack.c.b16 %v690, %v689
    %v699 = vpack.c.b16 %v692, %v691
    %v700 = vpack.c.b16 %v694, %v693
    %v708 = vsel %vm122, %v657, 0
    %v711 = vsel %vm122, %v658, 0
    %713 = vmatprep.subr.bf16.mxu0 0
    %714 = vmatpush1.bf16.msra.mxu0 %v695
    %715 = vmatprep.subr.bf16.mxu0 0
    %716 = vmatpush1.bf16.msra.mxu0 %v696
    %717 = vmatprep.subr.bf16.mxu0 0
    %718 = vmatpush1.bf16.msra.mxu0 %v697
    %719 = vmatprep.subr.bf16.mxu0 0
    %720 = vmatpush1.bf16.msra.mxu0 %v698
    %721 = vmatprep.subr.bf16.mxu0 0
    %722 = vmatpush1.bf16.msra.mxu0 %v699
    %723 = vmatprep.subr.bf16.mxu0 0
    %724 = vmatpush1.bf16.msra.mxu0 %v700
    %725 = vmatprep.subr.bf16.mxu0 0
    %726 = vmatpush1.bf16.msra.mxu0 0
    %727 = vmatprep.subr.bf16.mxu0 0
    %728 = vmatpush1.bf16.msra.mxu0 0
    %729 = vmatprep.subr.bf16.mxu0 0
    %730 = vmatpush1.bf16.msra.mxu0 0
    %731 = vmatprep.subr.bf16.mxu0 0
    %732 = vmatpush1.bf16.msra.mxu0 0
    %733 = vmatprep.subr.bf16.mxu0 0
    %734 = vmatpush1.bf16.msra.mxu0 0
    %735 = vmatprep.subr.bf16.mxu0 0
    %736 = vmatpush1.bf16.msra.mxu0 0
    %737 = vmatprep.subr.bf16.mxu0 0
    %738 = vmatpush1.bf16.msra.mxu0 0
    %739 = vmatprep.subr.bf16.mxu0 0
    %740 = vmatpush1.bf16.msra.mxu0 0
    %741 = vmatprep.subr.bf16.mxu0 0
    %742 = vmatpush1.bf16.msra.mxu0 0
    %743 = vmatprep.subr.bf16.mxu0 0
    %744 = vmatpush1.bf16.msra.mxu0 0
    %745 = vmatprep.mubr.bf16.mxu0 0
    %746 = vmatmul.mubr.bf16.gmra.mrb[0].mxu0 %v708
    %v747 = vpop.f32.mrb[0].mxu0
    %v748 = vadd.f32 %v472, %v747
    %v749 = vpop.f32.mrb[0].mxu0
    %v750 = vpop.f32.mrb[0].mxu0
    %v751 = vadd.f32 %v473, %v750
    %v752 = vpop.f32.mrb[0].mxu0
    %753 = vmatprep.mubr.bf16.mxu0 0
    %754 = vmatmul.mubr.bf16.gmra.mrb[0].mxu0 %v711
    %v755 = vpop.f32.mrb[0].mxu0
    %v756 = vadd.f32 %v474, %v755
    %v757 = vpop.f32.mrb[0].mxu0
    %v758 = vpop.f32.mrb[0].mxu0
    %v759 = vadd.f32 %v475, %v758
    %v760 = vpop.f32.mrb[0].mxu0
    %761 = vdwg.mxu0
    %v762 = vmax.f32 %v748, 0.0
    %v763 = vmax.f32 %v751, 0.0
    %v764 = vmax.f32 %v756, 0.0
    %v765 = vmax.f32 %v759, 0.0
    %v766 = vadd.f32 %v762, %v178
    %v767 = vadd.f32 %v763, %v179
    %v768 = vadd.f32 %v764, %v180
    %v769 = vadd.f32 %v765, %v181
    %v770 = vrot.slane %v766, 7
    %v771 = vrot.slane %v767, 7
    %v772 = vrot.slane %v768, 7
    %v773 = vrot.slane %v769, 7
    %v774 = vsel %vm38, %v772, %v773
    %v775 = vsel %vm38, %v771, %v772
    %v776 = vsel %vm38, %v770, %v771
    %v777 = vsel %vm38, %v773, %v770
    %v778 = vrot.slane %v766, 1
    %v779 = vrot.slane %v767, 1
    %v780 = vrot.slane %v768, 1
    %v781 = vrot.slane %v769, 1
    %v782 = vsel %vm47, %v780, %v781
    %v783 = vsel %vm47, %v779, %v780
    %v784 = vsel %vm47, %v778, %v779
    %v785 = vsel %vm47, %v781, %v778
    %v786 = vmul.f32 %v777, %v20
    %v787 = vmul.f32 %v776, %v21
    %v788 = vmul.f32 %v775, %v22
    %v789 = vmul.f32 %v774, %v23
    %v790 = vmul.f32 %v766, %v24
    %v791 = vmul.f32 %v767, %v25
    %v792 = vmul.f32 %v768, %v26
    %v793 = vmul.f32 %v769, %v27
    %v794 = vadd.f32 %v786, %v790
    %v795 = vadd.f32 %v787, %v791
    %v796 = vadd.f32 %v788, %v792
    %v797 = vadd.f32 %v789, %v793
    %v798 = vmul.f32 %v784, %v28
    %v799 = vmul.f32 %v783, %v29
    %v800 = vmul.f32 %v782, %v30
    %v801 = vmul.f32 %v785, %v31
    %v802 = vadd.f32 %v794, %v798
    %v803 = vadd.f32 %v795, %v799
    %v804 = vadd.f32 %v796, %v800
    %v805 = vadd.f32 %v797, %v801
    %v806 = vpack.c.bf16 %v803, %v802
    %v807 = vpack.c.bf16 %v805, %v804
    %v809 = vsel %vm122, %v806, 0
    %v812 = vsel %vm122, %v807, 0
    %814 = vmatprep.subr.bf16.mxu0 0
    %815 = vmatpush1.bf16.msra.mxu0 %v260
    %816 = vmatprep.subr.bf16.mxu0 0
    %817 = vmatpush1.bf16.msra.mxu0 %v261
    %818 = vmatprep.subr.bf16.mxu0 0
    %819 = vmatpush1.bf16.msra.mxu0 %v262
    %820 = vmatprep.subr.bf16.mxu0 0
    %821 = vmatpush1.bf16.msra.mxu0 %v263
    %822 = vmatprep.subr.bf16.mxu0 0
    %823 = vmatpush1.bf16.msra.mxu0 %v264
    %824 = vmatprep.subr.bf16.mxu0 0
    %825 = vmatpush1.bf16.msra.mxu0 %v265
    %826 = vmatprep.subr.bf16.mxu0 0
    %827 = vmatpush1.bf16.msra.mxu0 0
    %828 = vmatprep.subr.bf16.mxu0 0
    %829 = vmatpush1.bf16.msra.mxu0 0
    %830 = vmatprep.subr.bf16.mxu0 0
    %831 = vmatpush1.bf16.msra.mxu0 0
    %832 = vmatprep.subr.bf16.mxu0 0
    %833 = vmatpush1.bf16.msra.mxu0 0
    %834 = vmatprep.subr.bf16.mxu0 0
    %835 = vmatpush1.bf16.msra.mxu0 0
    %836 = vmatprep.subr.bf16.mxu0 0
    %837 = vmatpush1.bf16.msra.mxu0 0
    %838 = vmatprep.subr.bf16.mxu0 0
    %839 = vmatpush1.bf16.msra.mxu0 0
    %840 = vmatprep.subr.bf16.mxu0 0
    %841 = vmatpush1.bf16.msra.mxu0 0
    %842 = vmatprep.subr.bf16.mxu0 0
    %843 = vmatpush1.bf16.msra.mxu0 0
    %844 = vmatprep.subr.bf16.mxu0 0
    %845 = vmatpush1.bf16.msra.mxu0 0
    %846 = vmatprep.mubr.bf16.mxu0 0
    %847 = vmatmul.mubr.bf16.gmra.mrb[0].mxu0 %v809
    %v848 = vpop.f32.mrb[0].mxu0
    %v849 = vadd.f32 0.0, %v848
    %v850 = vpop.f32.mrb[0].mxu0
    %v851 = vpop.f32.mrb[0].mxu0
    %v852 = vadd.f32 0.0, %v851
    %v853 = vpop.f32.mrb[0].mxu0
    %854 = vmatprep.mubr.bf16.mxu0 0
    %855 = vmatmul.mubr.bf16.gmra.mrb[0].mxu0 %v812
    %v856 = vpop.f32.mrb[0].mxu0
    %v857 = vadd.f32 0.0, %v856
    %v858 = vpop.f32.mrb[0].mxu0
    %v859 = vpop.f32.mrb[0].mxu0
    %v860 = vadd.f32 0.0, %v859
    %v861 = vpop.f32.mrb[0].mxu0
    %862 = vdwg.mxu0
    %v863 = vmax.f32 %v849, 0.0
    %v864 = vmax.f32 %v852, 0.0
    %v865 = vmax.f32 %v857, 0.0
    %v866 = vmax.f32 %v860, 0.0
    %v867 = vrot.slane %v863, 7
    %v868 = vrot.slane %v864, 7
    %v869 = vrot.slane %v865, 7
    %v870 = vrot.slane %v866, 7
    %v871 = vsel %vm38, %v869, %v870
    %v872 = vsel %vm38, %v868, %v869
    %v873 = vsel %vm38, %v867, %v868
    %v874 = vsel %vm38, %v870, %v867
    %v875 = vrot.slane %v863, 1
    %v876 = vrot.slane %v864, 1
    %v877 = vrot.slane %v865, 1
    %v878 = vrot.slane %v866, 1
    %v879 = vsel %vm47, %v877, %v878
    %v880 = vsel %vm47, %v876, %v877
    %v881 = vsel %vm47, %v875, %v876
    %v882 = vsel %vm47, %v878, %v875
    %v883 = vmul.f32 %v874, %v20
    %v884 = vmul.f32 %v873, %v21
    %v885 = vmul.f32 %v872, %v22
    %v886 = vmul.f32 %v871, %v23
    %v887 = vmul.f32 %v863, %v24
    %v888 = vmul.f32 %v864, %v25
    %v889 = vmul.f32 %v865, %v26
    %v890 = vmul.f32 %v866, %v27
    %v891 = vadd.f32 %v883, %v887
    %v892 = vadd.f32 %v884, %v888
    %v893 = vadd.f32 %v885, %v889
    %v894 = vadd.f32 %v886, %v890
    %v895 = vmul.f32 %v881, %v28
    %v896 = vmul.f32 %v880, %v29
    %v897 = vmul.f32 %v879, %v30
    %v898 = vmul.f32 %v882, %v31
    %v899 = vadd.f32 %v891, %v895
    %v900 = vadd.f32 %v892, %v896
    %v901 = vadd.f32 %v893, %v897
    %v902 = vadd.f32 %v894, %v898
    %v903 = vpack.c.bf16 %v900, %v899
    %v904 = vpack.c.bf16 %v902, %v901
    %v906 = vsel %vm122, %v903, 0
    %v909 = vsel %vm122, %v904, 0
    %911 = vmatprep.subr.bf16.mxu0 0
    %912 = vmatpush1.bf16.msra.mxu0 %v405
    %913 = vmatprep.subr.bf16.mxu0 0
    %914 = vmatpush1.bf16.msra.mxu0 %v406
    %915 = vmatprep.subr.bf16.mxu0 0
    %916 = vmatpush1.bf16.msra.mxu0 %v407
    %917 = vmatprep.subr.bf16.mxu0 0
    %918 = vmatpush1.bf16.msra.mxu0 %v408
    %919 = vmatprep.subr.bf16.mxu0 0
    %920 = vmatpush1.bf16.msra.mxu0 %v409
    %921 = vmatprep.subr.bf16.mxu0 0
    %922 = vmatpush1.bf16.msra.mxu0 %v410
    %923 = vmatprep.subr.bf16.mxu0 0
    %924 = vmatpush1.bf16.msra.mxu0 0
    %925 = vmatprep.subr.bf16.mxu0 0
    %926 = vmatpush1.bf16.msra.mxu0 0
    %927 = vmatprep.subr.bf16.mxu0 0
    %928 = vmatpush1.bf16.msra.mxu0 0
    %929 = vmatprep.subr.bf16.mxu0 0
    %930 = vmatpush1.bf16.msra.mxu0 0
    %931 = vmatprep.subr.bf16.mxu0 0
    %932 = vmatpush1.bf16.msra.mxu0 0
    %933 = vmatprep.subr.bf16.mxu0 0
    %934 = vmatpush1.bf16.msra.mxu0 0
    %935 = vmatprep.subr.bf16.mxu0 0
    %936 = vmatpush1.bf16.msra.mxu0 0
    %937 = vmatprep.subr.bf16.mxu0 0
    %938 = vmatpush1.bf16.msra.mxu0 0
    %939 = vmatprep.subr.bf16.mxu0 0
    %940 = vmatpush1.bf16.msra.mxu0 0
    %941 = vmatprep.subr.bf16.mxu0 0
    %942 = vmatpush1.bf16.msra.mxu0 0
    %943 = vmatprep.mubr.bf16.mxu0 0
    %944 = vmatmul.mubr.bf16.gmra.mrb[0].mxu0 %v906
    %v945 = vpop.f32.mrb[0].mxu0
    %v946 = vadd.f32 %v766, %v945
    %v947 = vpop.f32.mrb[0].mxu0
    %v948 = vpop.f32.mrb[0].mxu0
    %v949 = vadd.f32 %v767, %v948
    %v950 = vpop.f32.mrb[0].mxu0
    %951 = vmatprep.mubr.bf16.mxu0 0
    %952 = vmatmul.mubr.bf16.gmra.mrb[0].mxu0 %v909
    %v953 = vpop.f32.mrb[0].mxu0
    %v954 = vadd.f32 %v768, %v953
    %v955 = vpop.f32.mrb[0].mxu0
    %v956 = vpop.f32.mrb[0].mxu0
    %v957 = vadd.f32 %v769, %v956
    %v958 = vpop.f32.mrb[0].mxu0
    %959 = vdwg.mxu0
    %v960 = vmax.f32 %v946, 0.0
    %v961 = vmax.f32 %v949, 0.0
    %v962 = vmax.f32 %v954, 0.0
    %v963 = vmax.f32 %v957, 0.0
    %v964 = vrot.slane %v960, 7
    %v965 = vrot.slane %v961, 7
    %v966 = vrot.slane %v962, 7
    %v967 = vrot.slane %v963, 7
    %v968 = vsel %vm38, %v966, %v967
    %v969 = vsel %vm38, %v965, %v966
    %v970 = vsel %vm38, %v964, %v965
    %v971 = vsel %vm38, %v967, %v964
    %v972 = vrot.slane %v960, 1
    %v973 = vrot.slane %v961, 1
    %v974 = vrot.slane %v962, 1
    %v975 = vrot.slane %v963, 1
    %v976 = vsel %vm47, %v974, %v975
    %v977 = vsel %vm47, %v973, %v974
    %v978 = vsel %vm47, %v972, %v973
    %v979 = vsel %vm47, %v975, %v972
    %v980 = vmul.f32 %v971, %v20
    %v981 = vmul.f32 %v970, %v21
    %v982 = vmul.f32 %v969, %v22
    %v983 = vmul.f32 %v968, %v23
    %v984 = vmul.f32 %v960, %v24
    %v985 = vmul.f32 %v961, %v25
    %v986 = vmul.f32 %v962, %v26
    %v987 = vmul.f32 %v963, %v27
    %v988 = vadd.f32 %v980, %v984
    %v989 = vadd.f32 %v981, %v985
    %v990 = vadd.f32 %v982, %v986
    %v991 = vadd.f32 %v983, %v987
    %v992 = vmul.f32 %v978, %v28
    %v993 = vmul.f32 %v977, %v29
    %v994 = vmul.f32 %v976, %v30
    %v995 = vmul.f32 %v979, %v31
    %v996 = vadd.f32 %v988, %v992
    %v997 = vadd.f32 %v989, %v993
    %v998 = vadd.f32 %v990, %v994
    %v999 = vadd.f32 %v991, %v995
    %v1000 = vpack.c.bf16 %v997, %v996
    %v1001 = vpack.c.bf16 %v999, %v998
    %v1003 = vsel %vm122, %v1000, 0
    %v1006 = vsel %vm122, %v1001, 0
    %1008 = vmatprep.subr.bf16.mxu0 0
    %1009 = vmatpush1.bf16.msra.mxu0 %v550
    %1010 = vmatprep.subr.bf16.mxu0 0
    %1011 = vmatpush1.bf16.msra.mxu0 %v551
    %1012 = vmatprep.subr.bf16.mxu0 0
    %1013 = vmatpush1.bf16.msra.mxu0 %v552
    %1014 = vmatprep.subr.bf16.mxu0 0
    %1015 = vmatpush1.bf16.msra.mxu0 %v553
    %1016 = vmatprep.subr.bf16.mxu0 0
    %1017 = vmatpush1.bf16.msra.mxu0 %v554
    %1018 = vmatprep.subr.bf16.mxu0 0
    %1019 = vmatpush1.bf16.msra.mxu0 %v555
    %1020 = vmatprep.subr.bf16.mxu0 0
    %1021 = vmatpush1.bf16.msra.mxu0 0
    %1022 = vmatprep.subr.bf16.mxu0 0
    %1023 = vmatpush1.bf16.msra.mxu0 0
    %1024 = vmatprep.subr.bf16.mxu0 0
    %1025 = vmatpush1.bf16.msra.mxu0 0
    %1026 = vmatprep.subr.bf16.mxu0 0
    %1027 = vmatpush1.bf16.msra.mxu0 0
    %1028 = vmatprep.subr.bf16.mxu0 0
    %1029 = vmatpush1.bf16.msra.mxu0 0
    %1030 = vmatprep.subr.bf16.mxu0 0
    %1031 = vmatpush1.bf16.msra.mxu0 0
    %1032 = vmatprep.subr.bf16.mxu0 0
    %1033 = vmatpush1.bf16.msra.mxu0 0
    %1034 = vmatprep.subr.bf16.mxu0 0
    %1035 = vmatpush1.bf16.msra.mxu0 0
    %1036 = vmatprep.subr.bf16.mxu0 0
    %1037 = vmatpush1.bf16.msra.mxu0 0
    %1038 = vmatprep.subr.bf16.mxu0 0
    %1039 = vmatpush1.bf16.msra.mxu0 0
    %1040 = vmatprep.mubr.bf16.mxu0 0
    %1041 = vmatmul.mubr.bf16.gmra.mrb[0].mxu0 %v1003
    %v1042 = vpop.f32.mrb[0].mxu0
    %v1043 = vadd.f32 0.0, %v1042
    %v1044 = vpop.f32.mrb[0].mxu0
    %v1045 = vpop.f32.mrb[0].mxu0
    %v1046 = vadd.f32 0.0, %v1045
    %v1047 = vpop.f32.mrb[0].mxu0
    %1048 = vmatprep.mubr.bf16.mxu0 0
    %1049 = vmatmul.mubr.bf16.gmra.mrb[0].mxu0 %v1006
    %v1050 = vpop.f32.mrb[0].mxu0
    %v1051 = vadd.f32 0.0, %v1050
    %v1052 = vpop.f32.mrb[0].mxu0
    %v1053 = vpop.f32.mrb[0].mxu0
    %v1054 = vadd.f32 0.0, %v1053
    %v1055 = vpop.f32.mrb[0].mxu0
    %1056 = vdwg.mxu0
    %v1057 = vmax.f32 %v1043, 0.0
    %v1058 = vmax.f32 %v1046, 0.0
    %v1059 = vmax.f32 %v1051, 0.0
    %v1060 = vmax.f32 %v1054, 0.0
    %v1061 = vrot.slane %v1057, 7
    %v1062 = vrot.slane %v1058, 7
    %v1063 = vrot.slane %v1059, 7
    %v1064 = vrot.slane %v1060, 7
    %v1065 = vsel %vm38, %v1063, %v1064
    %v1066 = vsel %vm38, %v1062, %v1063
    %v1067 = vsel %vm38, %v1061, %v1062
    %v1068 = vsel %vm38, %v1064, %v1061
    %v1069 = vrot.slane %v1057, 1
    %v1070 = vrot.slane %v1058, 1
    %v1071 = vrot.slane %v1059, 1
    %v1072 = vrot.slane %v1060, 1
    %v1073 = vsel %vm47, %v1071, %v1072
    %v1074 = vsel %vm47, %v1070, %v1071
    %v1075 = vsel %vm47, %v1069, %v1070
    %v1076 = vsel %vm47, %v1072, %v1069
    %v1077 = vmul.f32 %v1068, %v20
    %v1078 = vmul.f32 %v1067, %v21
    %v1079 = vmul.f32 %v1066, %v22
    %v1080 = vmul.f32 %v1065, %v23
    %v1081 = vmul.f32 %v1057, %v24
    %v1082 = vmul.f32 %v1058, %v25
    %v1083 = vmul.f32 %v1059, %v26
    %v1084 = vmul.f32 %v1060, %v27
    %v1085 = vadd.f32 %v1077, %v1081
    %v1086 = vadd.f32 %v1078, %v1082
    %v1087 = vadd.f32 %v1079, %v1083
    %v1088 = vadd.f32 %v1080, %v1084
    %v1089 = vmul.f32 %v1075, %v28
    %v1090 = vmul.f32 %v1074, %v29
    %v1091 = vmul.f32 %v1073, %v30
    %v1092 = vmul.f32 %v1076, %v31
    %v1093 = vadd.f32 %v1085, %v1089
    %v1094 = vadd.f32 %v1086, %v1090
    %v1095 = vadd.f32 %v1087, %v1091
    %v1096 = vadd.f32 %v1088, %v1092
    %v1097 = vpack.c.bf16 %v1094, %v1093
    %v1098 = vpack.c.bf16 %v1096, %v1095
    %v1100 = vsel %vm122, %v1097, 0
    %v1103 = vsel %vm122, %v1098, 0
    %1105 = vmatprep.subr.bf16.mxu0 0
    %1106 = vmatpush1.bf16.msra.mxu0 %v695
    %1107 = vmatprep.subr.bf16.mxu0 0
    %1108 = vmatpush1.bf16.msra.mxu0 %v696
    %1109 = vmatprep.subr.bf16.mxu0 0
    %1110 = vmatpush1.bf16.msra.mxu0 %v697
    %1111 = vmatprep.subr.bf16.mxu0 0
    %1112 = vmatpush1.bf16.msra.mxu0 %v698
    %1113 = vmatprep.subr.bf16.mxu0 0
    %1114 = vmatpush1.bf16.msra.mxu0 %v699
    %1115 = vmatprep.subr.bf16.mxu0 0
    %1116 = vmatpush1.bf16.msra.mxu0 %v700
    %1117 = vmatprep.subr.bf16.mxu0 0
    %1118 = vmatpush1.bf16.msra.mxu0 0
    %1119 = vmatprep.subr.bf16.mxu0 0
    %1120 = vmatpush1.bf16.msra.mxu0 0
    %1121 = vmatprep.subr.bf16.mxu0 0
    %1122 = vmatpush1.bf16.msra.mxu0 0
    %1123 = vmatprep.subr.bf16.mxu0 0
    %1124 = vmatpush1.bf16.msra.mxu0 0
    %1125 = vmatprep.subr.bf16.mxu0 0
    %1126 = vmatpush1.bf16.msra.mxu0 0
    %1127 = vmatprep.subr.bf16.mxu0 0
    %1128 = vmatpush1.bf16.msra.mxu0 0
    %1129 = vmatprep.subr.bf16.mxu0 0
    %1130 = vmatpush1.bf16.msra.mxu0 0
    %1131 = vmatprep.subr.bf16.mxu0 0
    %1132 = vmatpush1.bf16.msra.mxu0 0
    %1133 = vmatprep.subr.bf16.mxu0 0
    %1134 = vmatpush1.bf16.msra.mxu0 0
    %1135 = vmatprep.subr.bf16.mxu0 0
    %1136 = vmatpush1.bf16.msra.mxu0 0
    %1137 = vmatprep.mubr.bf16.mxu0 0
    %1138 = vmatmul.mubr.bf16.gmra.mrb[0].mxu0 %v1100
    %v1139 = vpop.f32.mrb[0].mxu0
    %v1140 = vadd.f32 %v960, %v1139
    %v1141 = vpop.f32.mrb[0].mxu0
    %v1142 = vpop.f32.mrb[0].mxu0
    %v1143 = vadd.f32 %v961, %v1142
    %v1144 = vpop.f32.mrb[0].mxu0
    %1145 = vmatprep.mubr.bf16.mxu0 0
    %1146 = vmatmul.mubr.bf16.gmra.mrb[0].mxu0 %v1103
    %v1147 = vpop.f32.mrb[0].mxu0
    %v1148 = vadd.f32 %v962, %v1147
    %v1149 = vpop.f32.mrb[0].mxu0
    %v1150 = vpop.f32.mrb[0].mxu0
    %v1151 = vadd.f32 %v963, %v1150
    %v1152 = vpop.f32.mrb[0].mxu0
    %1153 = vdwg.mxu0
    %v1154 = vmax.f32 %v1140, 0.0
    %v1155 = vmax.f32 %v1143, 0.0
    %v1156 = vmax.f32 %v1148, 0.0
    %v1157 = vmax.f32 %v1151, 0.0
    %v1158 = vrot.slane %v1154, 7
    %v1159 = vrot.slane %v1155, 7
    %v1160 = vrot.slane %v1156, 7
    %v1161 = vrot.slane %v1157, 7
    %v1162 = vsel %vm38, %v1160, %v1161
    %v1163 = vsel %vm38, %v1159, %v1160
    %v1164 = vsel %vm38, %v1158, %v1159
    %v1165 = vsel %vm38, %v1161, %v1158
    %v1166 = vrot.slane %v1154, 1
    %v1167 = vrot.slane %v1155, 1
    %v1168 = vrot.slane %v1156, 1
    %v1169 = vrot.slane %v1157, 1
    %v1170 = vsel %vm47, %v1168, %v1169
    %v1171 = vsel %vm47, %v1167, %v1168
    %v1172 = vsel %vm47, %v1166, %v1167
    %v1173 = vsel %vm47, %v1169, %v1166
    %v1174 = vmul.f32 %v1165, %v20
    %v1175 = vmul.f32 %v1164, %v21
    %v1176 = vmul.f32 %v1163, %v22
    %v1177 = vmul.f32 %v1162, %v23
    %v1178 = vmul.f32 %v1154, %v24
    %v1179 = vmul.f32 %v1155, %v25
    %v1180 = vmul.f32 %v1156, %v26
    %v1181 = vmul.f32 %v1157, %v27
    %v1182 = vadd.f32 %v1174, %v1178
    %v1183 = vadd.f32 %v1175, %v1179
    %v1184 = vadd.f32 %v1176, %v1180
    %v1185 = vadd.f32 %v1177, %v1181
    %v1186 = vmul.f32 %v1172, %v28
    %v1187 = vmul.f32 %v1171, %v29
    %v1188 = vmul.f32 %v1170, %v30
    %v1189 = vmul.f32 %v1173, %v31
    %v1190 = vadd.f32 %v1182, %v1186
    %v1191 = vadd.f32 %v1183, %v1187
    %v1192 = vadd.f32 %v1184, %v1188
    %v1193 = vadd.f32 %v1185, %v1189
    %v1194 = vpack.c.bf16 %v1191, %v1190
    %v1195 = vpack.c.bf16 %v1193, %v1192
    %v1196 = vld [vmem:[%s1 + $0xf0] sm:$0xf]
    %v1197 = vld [vmem:[%s1 + $0xf4] sm:$0xf]
    %v1198 = vld [vmem:[%s1 + $0xf8] sm:$0xf]
    %v1199 = vld [vmem:[%s1 + $0xfc] sm:$0xf]
    %v1200 = vld [vmem:[%s1 + $0x100] sm:$0xf]
    %v1201 = vld [vmem:[%s1 + $0x104] sm:$0xf]
    %v1202 = vld [vmem:[%s1 + $0x108] sm:$0xf]
    %v1203 = vld [vmem:[%s1 + $0x10c] sm:$0xf]
    %v1204 = vld [vmem:[%s1 + $0x110] sm:$0xf]
    %v1205 = vld [vmem:[%s1 + $0x114] sm:$0xf]
    %v1206 = vld [vmem:[%s1 + $0x118] sm:$0xf]
    %v1207 = vld [vmem:[%s1 + $0x11c] sm:$0xf]
    %v1220 = vunpack.c.l.b16 %v1196
    %v1221 = vunpack.c.l.b16 %v1197
    %v1222 = vunpack.c.l.b16 %v1198
    %v1223 = vunpack.c.l.b16 %v1199
    %v1224 = vunpack.c.l.b16 %v1200
    %v1225 = vunpack.c.l.b16 %v1201
    %v1226 = vunpack.c.l.b16 %v1202
    %v1227 = vunpack.c.l.b16 %v1203
    %v1228 = vunpack.c.l.b16 %v1204
    %v1229 = vunpack.c.l.b16 %v1205
    %v1230 = vunpack.c.l.b16 %v1206
    %v1231 = vunpack.c.l.b16 %v1207
    %v1232 = vpack.c.b16 %v1221, %v1220
    %v1233 = vpack.c.b16 %v1223, %v1222
    %v1234 = vpack.c.b16 %v1225, %v1224
    %v1235 = vpack.c.b16 %v1227, %v1226
    %v1236 = vpack.c.b16 %v1229, %v1228
    %v1237 = vpack.c.b16 %v1231, %v1230
    %v1245 = vsel %vm122, %v1194, 0
    %v1248 = vsel %vm122, %v1195, 0
    %1250 = vmatprep.subr.bf16.mxu0 0
    %1251 = vmatpush1.bf16.msra.mxu0 %v1232
    %1252 = vmatprep.subr.bf16.mxu0 0
    %1253 = vmatpush1.bf16.msra.mxu0 %v1233
    %1254 = vmatprep.subr.bf16.mxu0 0
    %1255 = vmatpush1.bf16.msra.mxu0 %v1234
    %1256 = vmatprep.subr.bf16.mxu0 0
    %1257 = vmatpush1.bf16.msra.mxu0 %v1235
    %1258 = vmatprep.subr.bf16.mxu0 0
    %1259 = vmatpush1.bf16.msra.mxu0 %v1236
    %1260 = vmatprep.subr.bf16.mxu0 0
    %1261 = vmatpush1.bf16.msra.mxu0 %v1237
    %1262 = vmatprep.subr.bf16.mxu0 0
    %1263 = vmatpush1.bf16.msra.mxu0 0
    %1264 = vmatprep.subr.bf16.mxu0 0
    %1265 = vmatpush1.bf16.msra.mxu0 0
    %1266 = vmatprep.subr.bf16.mxu0 0
    %1267 = vmatpush1.bf16.msra.mxu0 0
    %1268 = vmatprep.subr.bf16.mxu0 0
    %1269 = vmatpush1.bf16.msra.mxu0 0
    %1270 = vmatprep.subr.bf16.mxu0 0
    %1271 = vmatpush1.bf16.msra.mxu0 0
    %1272 = vmatprep.subr.bf16.mxu0 0
    %1273 = vmatpush1.bf16.msra.mxu0 0
    %1274 = vmatprep.subr.bf16.mxu0 0
    %1275 = vmatpush1.bf16.msra.mxu0 0
    %1276 = vmatprep.subr.bf16.mxu0 0
    %1277 = vmatpush1.bf16.msra.mxu0 0
    %1278 = vmatprep.subr.bf16.mxu0 0
    %1279 = vmatpush1.bf16.msra.mxu0 0
    %1280 = vmatprep.subr.bf16.mxu0 0
    %1281 = vmatpush1.bf16.msra.mxu0 0
    %1282 = vmatprep.mubr.bf16.mxu0 0
    %1283 = vmatmul.mubr.bf16.gmra.mrb[0].mxu0 %v1245
    %v1284 = vpop.f32.mrb[0].mxu0
    %v1285 = vadd.f32 0.0, %v1284
    %v1286 = vpop.f32.mrb[0].mxu0
    %v1287 = vpop.f32.mrb[0].mxu0
    %v1288 = vadd.f32 0.0, %v1287
    %v1289 = vpop.f32.mrb[0].mxu0
    %1290 = vmatprep.mubr.bf16.mxu0 0
    %1291 = vmatmul.mubr.bf16.gmra.mrb[0].mxu0 %v1248
    %v1292 = vpop.f32.mrb[0].mxu0
    %v1293 = vadd.f32 0.0, %v1292
    %v1294 = vpop.f32.mrb[0].mxu0
    %v1295 = vpop.f32.mrb[0].mxu0
    %v1296 = vadd.f32 0.0, %v1295
    %v1297 = vpop.f32.mrb[0].mxu0
    %1298 = vdwg.mxu0
    %v1299 = vmax.f32 %v1285, 0.0
    %v1300 = vmax.f32 %v1288, 0.0
    %v1301 = vmax.f32 %v1293, 0.0
    %v1302 = vmax.f32 %v1296, 0.0
    %v1303 = vrot.slane %v1299, 7
    %v1304 = vrot.slane %v1300, 7
    %v1305 = vrot.slane %v1301, 7
    %v1306 = vrot.slane %v1302, 7
    %v1307 = vsel %vm38, %v1305, %v1306
    %v1308 = vsel %vm38, %v1304, %v1305
    %v1309 = vsel %vm38, %v1303, %v1304
    %v1310 = vsel %vm38, %v1306, %v1303
    %v1311 = vrot.slane %v1299, 1
    %v1312 = vrot.slane %v1300, 1
    %v1313 = vrot.slane %v1301, 1
    %v1314 = vrot.slane %v1302, 1
    %v1315 = vsel %vm47, %v1313, %v1314
    %v1316 = vsel %vm47, %v1312, %v1313
    %v1317 = vsel %vm47, %v1311, %v1312
    %v1318 = vsel %vm47, %v1314, %v1311
    %v1319 = vmul.f32 %v1310, %v20
    %v1320 = vmul.f32 %v1309, %v21
    %v1321 = vmul.f32 %v1308, %v22
    %v1322 = vmul.f32 %v1307, %v23
    %v1323 = vmul.f32 %v1299, %v24
    %v1324 = vmul.f32 %v1300, %v25
    %v1325 = vmul.f32 %v1301, %v26
    %v1326 = vmul.f32 %v1302, %v27
    %v1327 = vadd.f32 %v1319, %v1323
    %v1328 = vadd.f32 %v1320, %v1324
    %v1329 = vadd.f32 %v1321, %v1325
    %v1330 = vadd.f32 %v1322, %v1326
    %v1331 = vmul.f32 %v1317, %v28
    %v1332 = vmul.f32 %v1316, %v29
    %v1333 = vmul.f32 %v1315, %v30
    %v1334 = vmul.f32 %v1318, %v31
    %v1335 = vadd.f32 %v1327, %v1331
    %v1336 = vadd.f32 %v1328, %v1332
    %v1337 = vadd.f32 %v1329, %v1333
    %v1338 = vadd.f32 %v1330, %v1334
    %v1339 = vpack.c.bf16 %v1336, %v1335
    %v1340 = vpack.c.bf16 %v1338, %v1337
    %v1341 = vld [vmem:[%s1 + $0x120] sm:$0xf]
    %v1342 = vld [vmem:[%s1 + $0x124] sm:$0xf]
    %v1343 = vld [vmem:[%s1 + $0x128] sm:$0xf]
    %v1344 = vld [vmem:[%s1 + $0x12c] sm:$0xf]
    %v1345 = vld [vmem:[%s1 + $0x130] sm:$0xf]
    %v1346 = vld [vmem:[%s1 + $0x134] sm:$0xf]
    %v1347 = vld [vmem:[%s1 + $0x138] sm:$0xf]
    %v1348 = vld [vmem:[%s1 + $0x13c] sm:$0xf]
    %v1349 = vld [vmem:[%s1 + $0x140] sm:$0xf]
    %v1350 = vld [vmem:[%s1 + $0x144] sm:$0xf]
    %v1351 = vld [vmem:[%s1 + $0x148] sm:$0xf]
    %v1352 = vld [vmem:[%s1 + $0x14c] sm:$0xf]
    %v1365 = vunpack.c.l.b16 %v1341
    %v1366 = vunpack.c.l.b16 %v1342
    %v1367 = vunpack.c.l.b16 %v1343
    %v1368 = vunpack.c.l.b16 %v1344
    %v1369 = vunpack.c.l.b16 %v1345
    %v1370 = vunpack.c.l.b16 %v1346
    %v1371 = vunpack.c.l.b16 %v1347
    %v1372 = vunpack.c.l.b16 %v1348
    %v1373 = vunpack.c.l.b16 %v1349
    %v1374 = vunpack.c.l.b16 %v1350
    %v1375 = vunpack.c.l.b16 %v1351
    %v1376 = vunpack.c.l.b16 %v1352
    %v1377 = vpack.c.b16 %v1366, %v1365
    %v1378 = vpack.c.b16 %v1368, %v1367
    %v1379 = vpack.c.b16 %v1370, %v1369
    %v1380 = vpack.c.b16 %v1372, %v1371
    %v1381 = vpack.c.b16 %v1374, %v1373
    %v1382 = vpack.c.b16 %v1376, %v1375
    %v1390 = vsel %vm122, %v1339, 0
    %v1393 = vsel %vm122, %v1340, 0
    %1395 = vmatprep.subr.bf16.mxu0 0
    %1396 = vmatpush1.bf16.msra.mxu0 %v1377
    %1397 = vmatprep.subr.bf16.mxu0 0
    %1398 = vmatpush1.bf16.msra.mxu0 %v1378
    %1399 = vmatprep.subr.bf16.mxu0 0
    %1400 = vmatpush1.bf16.msra.mxu0 %v1379
    %1401 = vmatprep.subr.bf16.mxu0 0
    %1402 = vmatpush1.bf16.msra.mxu0 %v1380
    %1403 = vmatprep.subr.bf16.mxu0 0
    %1404 = vmatpush1.bf16.msra.mxu0 %v1381
    %1405 = vmatprep.subr.bf16.mxu0 0
    %1406 = vmatpush1.bf16.msra.mxu0 %v1382
    %1407 = vmatprep.subr.bf16.mxu0 0
    %1408 = vmatpush1.bf16.msra.mxu0 0
    %1409 = vmatprep.subr.bf16.mxu0 0
    %1410 = vmatpush1.bf16.msra.mxu0 0
    %1411 = vmatprep.subr.bf16.mxu0 0
    %1412 = vmatpush1.bf16.msra.mxu0 0
    %1413 = vmatprep.subr.bf16.mxu0 0
    %1414 = vmatpush1.bf16.msra.mxu0 0
    %1415 = vmatprep.subr.bf16.mxu0 0
    %1416 = vmatpush1.bf16.msra.mxu0 0
    %1417 = vmatprep.subr.bf16.mxu0 0
    %1418 = vmatpush1.bf16.msra.mxu0 0
    %1419 = vmatprep.subr.bf16.mxu0 0
    %1420 = vmatpush1.bf16.msra.mxu0 0
    %1421 = vmatprep.subr.bf16.mxu0 0
    %1422 = vmatpush1.bf16.msra.mxu0 0
    %1423 = vmatprep.subr.bf16.mxu0 0
    %1424 = vmatpush1.bf16.msra.mxu0 0
    %1425 = vmatprep.subr.bf16.mxu0 0
    %1426 = vmatpush1.bf16.msra.mxu0 0
    %1427 = vmatprep.mubr.bf16.mxu0 0
    %1428 = vmatmul.mubr.bf16.gmra.mrb[0].mxu0 %v1390
    %v1429 = vpop.f32.mrb[0].mxu0
    %v1430 = vadd.f32 0.0, %v1429
    %v1431 = vpop.f32.mrb[0].mxu0
    %v1432 = vpop.f32.mrb[0].mxu0
    %v1433 = vadd.f32 0.0, %v1432
    %v1434 = vpop.f32.mrb[0].mxu0
    %1435 = vmatprep.mubr.bf16.mxu0 0
    %1436 = vmatmul.mubr.bf16.gmra.mrb[0].mxu0 %v1393
    %v1437 = vpop.f32.mrb[0].mxu0
    %v1438 = vadd.f32 0.0, %v1437
    %v1439 = vpop.f32.mrb[0].mxu0
    %v1440 = vpop.f32.mrb[0].mxu0
    %v1441 = vadd.f32 0.0, %v1440
    %v1442 = vpop.f32.mrb[0].mxu0
    %1443 = vdwg.mxu0
    %v1444 = vmax.f32 %v1430, 0.0
    %v1445 = vmax.f32 %v1433, 0.0
    %v1446 = vmax.f32 %v1438, 0.0
    %v1447 = vmax.f32 %v1441, 0.0
    %v1448 = vrot.slane %v1444, 7
    %v1449 = vrot.slane %v1445, 7
    %v1450 = vrot.slane %v1446, 7
    %v1451 = vrot.slane %v1447, 7
    %v1452 = vsel %vm38, %v1450, %v1451
    %v1453 = vsel %vm38, %v1449, %v1450
    %v1454 = vsel %vm38, %v1448, %v1449
    %v1455 = vsel %vm38, %v1451, %v1448
    %v1456 = vrot.slane %v1444, 1
    %v1457 = vrot.slane %v1445, 1
    %v1458 = vrot.slane %v1446, 1
    %v1459 = vrot.slane %v1447, 1
    %v1460 = vsel %vm47, %v1458, %v1459
    %v1461 = vsel %vm47, %v1457, %v1458
    %v1462 = vsel %vm47, %v1456, %v1457
    %v1463 = vsel %vm47, %v1459, %v1456
    %v1464 = vmul.f32 %v1455, %v20
    %v1465 = vmul.f32 %v1454, %v21
    %v1466 = vmul.f32 %v1453, %v22
    %v1467 = vmul.f32 %v1452, %v23
    %v1468 = vmul.f32 %v1444, %v24
    %v1469 = vmul.f32 %v1445, %v25
    %v1470 = vmul.f32 %v1446, %v26
    %v1471 = vmul.f32 %v1447, %v27
    %v1472 = vadd.f32 %v1464, %v1468
    %v1473 = vadd.f32 %v1465, %v1469
    %v1474 = vadd.f32 %v1466, %v1470
    %v1475 = vadd.f32 %v1467, %v1471
    %v1476 = vmul.f32 %v1462, %v28
    %v1477 = vmul.f32 %v1461, %v29
    %v1478 = vmul.f32 %v1460, %v30
    %v1479 = vmul.f32 %v1463, %v31
    %v1480 = vadd.f32 %v1472, %v1476
    %v1481 = vadd.f32 %v1473, %v1477
    %v1482 = vadd.f32 %v1474, %v1478
    %v1483 = vadd.f32 %v1475, %v1479
    %v1484 = vpack.c.bf16 %v1481, %v1480
    %v1485 = vpack.c.bf16 %v1483, %v1482
    %v1486 = vld [vmem:[%s2] sm:$0xf]
    %v1487 = vld [vmem:[%s2 + $0x4] sm:$0xf]
    %v1488 = vld [vmem:[%s2 + $0x8] sm:$0xf]
    %v1489 = vld [vmem:[%s2 + $0xc] sm:$0xf]
    %v1490 = vld [vmem:[%s2 + $0x10] sm:$0xf]
    %v1491 = vld [vmem:[%s2 + $0x14] sm:$0xf]
    %v1492 = vld [vmem:[%s2 + $0x18] sm:$0xf]
    %v1493 = vld [vmem:[%s2 + $0x1c] sm:$0xf]
    %v1494 = vld [vmem:[%s2 + $0x20] sm:$0xf]
    %v1495 = vld [vmem:[%s2 + $0x24] sm:$0xf]
    %v1496 = vld [vmem:[%s2 + $0x28] sm:$0xf]
    %v1497 = vld [vmem:[%s2 + $0x2c] sm:$0xf]
    %v1510 = vunpack.c.l.b16 %v1486
    %v1511 = vunpack.c.l.b16 %v1487
    %v1512 = vunpack.c.l.b16 %v1488
    %v1513 = vunpack.c.l.b16 %v1489
    %v1514 = vunpack.c.l.b16 %v1490
    %v1515 = vunpack.c.l.b16 %v1491
    %v1516 = vunpack.c.l.b16 %v1492
    %v1517 = vunpack.c.l.b16 %v1493
    %v1518 = vunpack.c.l.b16 %v1494
    %v1519 = vunpack.c.l.b16 %v1495
    %v1520 = vunpack.c.l.b16 %v1496
    %v1521 = vunpack.c.l.b16 %v1497
    %v1522 = vpack.c.b16 %v1511, %v1510
    %v1523 = vpack.c.b16 %v1513, %v1512
    %v1524 = vpack.c.b16 %v1515, %v1514
    %v1525 = vpack.c.b16 %v1517, %v1516
    %v1526 = vpack.c.b16 %v1519, %v1518
    %v1527 = vpack.c.b16 %v1521, %v1520
    %v1535 = vsel %vm122, %v1484, 0
    %v1538 = vsel %vm122, %v1485, 0
    %1540 = vmatprep.subr.bf16.mxu0 0
    %1541 = vmatpush1.bf16.msra.mxu0 %v1522
    %1542 = vmatprep.subr.bf16.mxu0 0
    %1543 = vmatpush1.bf16.msra.mxu0 %v1523
    %1544 = vmatprep.subr.bf16.mxu0 0
    %1545 = vmatpush1.bf16.msra.mxu0 %v1524
    %1546 = vmatprep.subr.bf16.mxu0 0
    %1547 = vmatpush1.bf16.msra.mxu0 %v1525
    %1548 = vmatprep.subr.bf16.mxu0 0
    %1549 = vmatpush1.bf16.msra.mxu0 %v1526
    %1550 = vmatprep.subr.bf16.mxu0 0
    %1551 = vmatpush1.bf16.msra.mxu0 %v1527
    %1552 = vmatprep.subr.bf16.mxu0 0
    %1553 = vmatpush1.bf16.msra.mxu0 0
    %1554 = vmatprep.subr.bf16.mxu0 0
    %1555 = vmatpush1.bf16.msra.mxu0 0
    %1556 = vmatprep.subr.bf16.mxu0 0
    %1557 = vmatpush1.bf16.msra.mxu0 0
    %1558 = vmatprep.subr.bf16.mxu0 0
    %1559 = vmatpush1.bf16.msra.mxu0 0
    %1560 = vmatprep.subr.bf16.mxu0 0
    %1561 = vmatpush1.bf16.msra.mxu0 0
    %1562 = vmatprep.subr.bf16.mxu0 0
    %1563 = vmatpush1.bf16.msra.mxu0 0
    %1564 = vmatprep.subr.bf16.mxu0 0
    %1565 = vmatpush1.bf16.msra.mxu0 0
    %1566 = vmatprep.subr.bf16.mxu0 0
    %1567 = vmatpush1.bf16.msra.mxu0 0
    %1568 = vmatprep.subr.bf16.mxu0 0
    %1569 = vmatpush1.bf16.msra.mxu0 0
    %1570 = vmatprep.subr.bf16.mxu0 0
    %1571 = vmatpush1.bf16.msra.mxu0 0
    %1572 = vmatprep.mubr.bf16.mxu0 0
    %1573 = vmatmul.mubr.bf16.gmra.mrb[0].mxu0 %v1535
    %v1574 = vpop.f32.mrb[0].mxu0
    %v1575 = vadd.f32 0.0, %v1574
    %v1576 = vpop.f32.mrb[0].mxu0
    %v1577 = vpop.f32.mrb[0].mxu0
    %v1578 = vadd.f32 0.0, %v1577
    %v1579 = vpop.f32.mrb[0].mxu0
    %1580 = vmatprep.mubr.bf16.mxu0 0
    %1581 = vmatmul.mubr.bf16.gmra.mrb[0].mxu0 %v1538
    %v1582 = vpop.f32.mrb[0].mxu0
    %v1583 = vadd.f32 0.0, %v1582
    %v1584 = vpop.f32.mrb[0].mxu0
    %v1585 = vpop.f32.mrb[0].mxu0
    %v1586 = vadd.f32 0.0, %v1585
    %v1587 = vpop.f32.mrb[0].mxu0
    %1588 = vdwg.mxu0
    %1589 = vst [vmem:[#allocation2] sm:$0xff] %v1575
    %1590 = vst [vmem:[#allocation2 + $0x8] sm:$0xff] %v1578
    %1591 = vst [vmem:[#allocation2 + $0x10] sm:$0xff] %v1583
    %1592 = vst [vmem:[#allocation2 + $0x18] sm:$0xff] %v1586
    // Predicated region
    $region14: #{tpu_custom_call.1} parent=1 // pred_check
      _
    $region15: #{tpu_custom_call.1} parent=1 // pred_check_branch
      %1594 = sbr.rel (0) target = $region17
    $region16: #{tpu_custom_call.1} parent=1 // pred_region
      %s1596 = ssub.s32 512, 512
      %1597 = vsyncadd [#allocation3], %s1596
      %s1598 = sshll.u32 [#allocation2], 4
      %s1599 = int_to_ptr.vmem [resolvable:$true] %s1598
      %1604 = dma.vmem_to_hbm [thread:$0]  %s1599, 512, %s3, [#allocation3], 128, 128, 8
    $region17: #{tpu_custom_call.1} parent=1 // pred_fallthru
      _
    // Predicated region
    $region18: #{tpu_custom_call.1} parent=1 // pred_check
      _
    $region19: #{tpu_custom_call.1} parent=1 // pred_check_branch
      %1606 = sbr.rel (0) target = $region21
    $region20: #{tpu_custom_call.1} parent=1 // pred_region
      %1607 = dma.done [#allocation3], 512
    $region21: #{tpu_custom_call.1} parent=1 // pred_fallthru
      _
    %1608 = vsyncpa [#allocation3], 1

</llo_original>
